<compile_context>
chip_gen: v5e
topology: v5e:2x2
jax: 0.10.0
libtpu: 0.0.40
codegen_flags: <defaults>
</compile_context>

<pallas_src>
import functools

import jax
import jax.numpy as jnp
from jax.experimental import pallas as pl
from jax.experimental.pallas import tpu as pltpu


def _round_up(x, m):
    return (x + m - 1) // m * m


def _cdiv(a, b):
    return -(-a // b)


_DEFAULT_VMEM = 64 * 1024 * 1024


def _vmem_capacity_bytes():
    """Physical VMEM of the local TPU generation (fallback: 64 MiB, the v7x size)."""
    try:
        info = pltpu.get_tpu_info()
        return int(getattr(info, "vmem_capacity_bytes", _DEFAULT_VMEM))
    except Exception:
        return _DEFAULT_VMEM


def _single_buffered(block_shape, index_map):
    """BlockSpec for operands whose block index never changes: 1 buffer, not 2."""
    try:
        return pl.BlockSpec(block_shape, index_map, pipeline_mode=pl.Buffered(1))
    except TypeError:  # older BlockSpec signature without pipeline_mode
        return pl.BlockSpec(block_shape, index_map)


# ----------------------------- Pallas kernel ------------------------------ #
def _conv_bn_relu_kernel(x_ref, w_ref, shift_ref, o_ref, *, stride, tile_h, wop, cpi):
    # x_ref:     (s*s, Hq, Wq, cpi)  stride-phase-split, zero-padded image (bf16)
    # w_ref:     (9, cpi, cpo)       BN-scale-folded conv weights (bf16), single-buffered
    # shift_ref: (1, cpo)            folded BN shift (f32)
    # o_ref:     (tile_p, cpo)       output row-band, tile_p = tile_h * wop
    tile_p = tile_h * wop
    r0 = pl.program_id(1) * tile_h               # first output row of this band
    acc = None
    for idx in range(9):                         # unrolled 3x3 taps, chained MXU accumulation
        kh, kw = idx // 3, idx % 3
        ph, dh = kh % stride, kh // stride       # stride phase / in-phase row offset
        pw, dw = kw % stride, kw // stride
        patch = x_ref[ph * stride + pw, pl.ds(r0 + dh, tile_h), pl.ds(dw, wop), :]
        contrib = jnp.dot(patch.reshape(tile_p, cpi), w_ref[idx],
                          preferred_element_type=jnp.float32)
        acc = contrib if acc is None else acc + contrib
    o_ref[...] = jnp.maximum(acc + shift_ref[...], 0.0).astype(o_ref.dtype)


# ------------------------------- glue (JAX) -------------------------------- #
def conv_bn_relu(x_nhwc, w_oihw, gamma, beta, mean, var, stride, *,
                 eps=1e-5, out_dtype=jnp.bfloat16, max_tile_p=2048):
    """Fused conv3x3(pad=1, stride) + BN(eval) + ReLU.

    Returns (N, Ho, Wo, Cpo) with Cpo = Cout rounded up to a multiple of 128;
    the lane-padding output channels are exactly zero.
    """
    N, H, W, Cx = x_nhwc.shape
    Cout, Cin_w = w_oihw.shape[0], w_oihw.shape[1]
    s = int(stride)
    cpi = _round_up(max(Cx, Cin_w), 128)          # lane-dense contraction
    cpo = _round_up(Cout, 128)                    # lane-dense output
    Ho = (H + 2 - 3) // s + 1
    Wo = (W + 2 - 3) // s + 1
    max_dh = 2 // s                               # extra in-phase rows / cols per band
    max_dw = 2 // s
    Hp, Wp = H + 2, W + 2

    # Output width padded to a sublane multiple so the per-tap reshape is layout-preserving.
    Wop = _round_up(Wo, 8)
    Wq = _round_up(max(Wop + max_dw, _cdiv(Wp, s)), 8)

    # ---- generation-aware VMEM budget and row-band sizing ----
    vmem_cap = _vmem_capacity_bytes()
    vmem_limit = max(32 * 1024 * 1024, int(min(0.75 * vmem_cap, 128 * 1024 * 1024)))
    budget = int(0.8 * vmem_limit)                # 20% headroom for compiler temporaries

    out_itemsize = jnp.dtype(out_dtype).itemsize
    w_bytes = 9 * cpi * cpo * 2                   # bf16, single-buffered
    shift_bytes = cpo * 4
    Hq_est = _cdiv(Hp, s) + 8                     # slack for ragged band padding
    img_bytes = s * s * Hq_est * Wq * cpi * 2
    img_bufs = 2 if (2 * img_bytes + w_bytes + shift_bytes) <= budget // 2 else 1

    rem = budget - img_bufs * img_bytes - w_bytes - shift_bytes
    # per-output-row VMEM: 2x output buffers + traced f32 accumulator + bf16 patch temps
    per_row = 2 * cpo * out_itemsize + 4 * cpo + 4 * cpi
    tile_p_cap = max(8, min(max_tile_p, rem // per_row if rem > 0 else 8))

    tile_h = max(1, min(Ho, tile_p_cap // Wop))
    n_bands = _cdiv(Ho, tile_h)
    tile_h = _cdiv(Ho, n_bands)                   # balanced bands; ragged padding < n_bands rows
    if Wop % 16 != 0 and tile_h % 2 == 1 and tile_h > 1:
        tile_h += 1                               # keep tile_p a multiple of 16 for bf16 stores
    n_bands = _cdiv(Ho, tile_h)
    Ho_pad = n_bands * tile_h
    tile_p = tile_h * Wop
    Hq = max(Ho_pad + max_dh, _cdiv(Hp, s))

    # --- activations: bf16, spatial pad=1, channel pad, stride phase split (1x bytes)
    xp = jnp.pad(x_nhwc.astype(jnp.bfloat16),
                 ((0, 0), (1, 1), (1, 1), (0, cpi - Cx)))
    xp = jnp.pad(xp, ((0, 0), (0, Hq * s - Hp), (0, Wq * s - Wp), (0, 0)))
    # xs[n, ph*s+pw, i, j, c] = xpad[n, i*s+ph, j*s+pw, c]
    xs = (xp.reshape(N, Hq, s, Wq, s, cpi)
            .transpose(0, 2, 4, 1, 3, 5)
            .reshape(N, s * s, Hq, Wq, cpi))

    # --- weights: OIHW -> (kh,kw,cin,cout), fold BN scale, zero-pad, bf16
    inv_std = jax.lax.rsqrt(var.astype(jnp.float32) + eps)
    scale = gamma.astype(jnp.float32) * inv_std
    shift = beta.astype(jnp.float32) - mean.astype(jnp.float32) * scale
    w = jnp.transpose(w_oihw, (2, 3, 1, 0)).astype(jnp.float32) * scale[None, None, None, :]
    w = jnp.pad(w, ((0, 0), (0, 0), (0, cpi - Cin_w), (0, cpo - Cout)))
    w = w.reshape(9, cpi, cpo).astype(jnp.bfloat16)
    shift_p = jnp.pad(shift, (0, cpo - Cout)).reshape(1, cpo)

    kernel = functools.partial(_conv_bn_relu_kernel,
                               stride=s, tile_h=tile_h, wop=Wop, cpi=cpi)
    P_pad = Ho_pad * Wop
    cost = pl.CostEstimate(
        flops=2 * N * P_pad * 9 * cpi * cpo,
        transcendentals=0,
        bytes_accessed=int(xs.size) * 2 + int(w.size) * 2 + N * P_pad * cpo * out_itemsize,
    )

    if img_bufs == 1:
        img_spec = _single_buffered((None, s * s, Hq, Wq, cpi),
                                    lambda n, t: (n, 0, 0, 0, 0))
    else:
        img_spec = pl.BlockSpec((None, s * s, Hq, Wq, cpi),
                                lambda n, t: (n, 0, 0, 0, 0))

    out = pl.pallas_call(
        kernel,
        out_shape=jax.ShapeDtypeStruct((N, P_pad, cpo), out_dtype),
        grid_spec=pltpu.PrefetchScalarGridSpec(
            num_scalar_prefetch=0,
            grid=(N, n_bands),
            in_specs=[
                img_spec,                                            # phase-split image (per n)
                _single_buffered((9, cpi, cpo), lambda n, t: (0, 0, 0)),   # resident weights
                _single_buffered((1, cpo), lambda n, t: (0, 0)),           # BN shift
            ],
            out_specs=pl.BlockSpec((None, tile_p, cpo), lambda n, t: (n, t, 0)),
        ),
        compiler_params=pltpu.CompilerParams(
            dimension_semantics=("parallel", "parallel"),
            vmem_limit_bytes=vmem_limit,
        ),
        cost_estimate=cost,
    )(xs, w, shift_p)
    # drop ragged-band rows and width-alignment columns (they hold relu(shift) garbage)
    return out.reshape(N, Ho_pad, Wop, cpo)[:, :Ho, :Wo, :]


def conv_block_forward(x_nchw, p, stride, *, max_tile_p=2048):
    """Pallas implementation of Conv_Block.forward (NCHW in, NCHW out, eval-mode BN)."""
    out_ch = p["w1"].shape[0]
    x = jnp.transpose(x_nchw, (0, 2, 3, 1))                          # NCHW -> NHWC
    y = conv_bn_relu(x, p["w1"], p["g1"], p["b1"], p["m1"], p["v1"], stride,
                     out_dtype=jnp.bfloat16, max_tile_p=max_tile_p)  # bf16 inter-layer
    y = conv_bn_relu(y, p["w2"], p["g2"], p["b2"], p["m2"], p["v2"], 1,
                     out_dtype=jnp.float32, max_tile_p=max_tile_p)
    y = y[..., :out_ch]                                              # drop lane padding
    return jnp.transpose(y, (0, 3, 1, 2))                            # NHWC -> NCHW


# --------------------------- pure-JAX reference ---------------------------- #
def conv_block_ref(x_nchw, p, stride, eps=1e-5):
    def conv(x, w, s):
        return jax.lax.conv_general_dilated(
            x, w, window_strides=(s, s), padding=((1, 1), (1, 1)),
            dimension_numbers=("NCHW", "OIHW", "NCHW"))

    def bn(x, g, b, m, v):
        g, b, m, v = (t[None, :, None, None] for t in (g, b, m, v))
        return (x - m) / jnp.sqrt(v + eps) * g + b

    y = jax.nn.relu(bn(conv(x_nchw, p["w1"], stride), p["g1"], p["b1"], p["m1"], p["v1"]))
    y = jax.nn.relu(bn(conv(y, p["w2"], 1), p["g2"], p["b2"], p["m2"], p["v2"]))
    return y


# ----------------------------- deterministic init -------------------------- #
def init_params(key, in_ch, out_ch):
    ks = jax.random.split(key, 10)
    return {
        "w1": 0.1 * jax.random.normal(ks[0], (out_ch, in_ch, 3, 3), jnp.float32),
        "w2": 0.1 * jax.random.normal(ks[1], (out_ch, out_ch, 3, 3), jnp.float32),
        "g1": 1.0 + 0.1 * jax.random.normal(ks[2], (out_ch,), jnp.float32),
        "b1": 0.1 * jax.random.normal(ks[3], (out_ch,), jnp.float32),
        "m1": 0.1 * jax.random.normal(ks[4], (out_ch,), jnp.float32),
        "v1": 0.5 + jnp.abs(jax.random.normal(ks[5], (out_ch,), jnp.float32)),
        "g2": 1.0 + 0.1 * jax.random.normal(ks[6], (out_ch,), jnp.float32),
        "b2": 0.1 * jax.random.normal(ks[7], (out_ch,), jnp.float32),
        "m2": 0.1 * jax.random.normal(ks[8], (out_ch,), jnp.float32),
        "v2": 0.5 + jnp.abs(jax.random.normal(ks[9], (out_ch,), jnp.float32)),
    }


if __name__ == "__main__":
    key = jax.random.PRNGKey(0)
    k_x1, k_p1, k_x2, k_p2 = jax.random.split(key, 4)

    # Test 1: stride-2 block, 16x16 input; max_tile_p=32 forces 2 row-bands per image,
    # exercising the (N, band) grid with chained MXU accumulation.
    N, IN_CH, OUT_CH, H, W, STRIDE = 2, 4, 8, 16, 16, 2
    x1 = jax.random.normal(k_x1, (N, IN_CH, H, W), jnp.float32)      # NCHW like PyTorch
    p1 = init_params(k_p1, IN_CH, OUT_CH)
    fwd1 = jax.jit(functools.partial(conv_block_forward, stride=STRIDE, max_tile_p=32))
    out1 = jax.block_until_ready(fwd1(x1, p1))
    ref1 = jax.block_until_ready(conv_block_ref(x1, p1, STRIDE))
    assert out1.shape == (N, OUT_CH, H // STRIDE, W // STRIDE), out1.shape
    # bf16 matmul inputs with f32 accumulation -> relaxed tolerance vs f32 reference.
    assert jnp.allclose(out1, ref1, atol=5e-2, rtol=5e-2), float(jnp.max(jnp.abs(out1 - ref1)))

    # Test 2: stride-1 block on an odd 11x11 image -> exercises ragged row-bands
    # (Ho=11 padded to 12) and the sublane-aligned output-width padding (Wo 11 -> 16).
    N2, IN2, OUT2, H2, W2 = 2, 3, 8, 11, 11
    x2 = jax.random.normal(k_x2, (N2, IN2, H2, W2), jnp.float32)
    p2 = init_params(k_p2, IN2, OUT2)
    fwd2 = jax.jit(functools.partial(conv_block_forward, stride=1, max_tile_p=48))
    out2 = jax.block_until_ready(fwd2(x2, p2))
    ref2 = jax.block_until_ready(conv_block_ref(x2, p2, 1))
    assert out2.shape == (N2, OUT2, H2, W2), out2.shape
    assert jnp.allclose(out2, ref2, atol=5e-2, rtol=5e-2), float(jnp.max(jnp.abs(out2 - ref2)))

    print("KERNEL_OK")
</pallas_src>

<mosaic_0001>
module attributes {stable_mosaic.version = 11 : i64} {
  func.func @_conv_bn_relu_kernel(%arg0: i32, %arg1: i32, %arg2: memref<1x4x9x16x128xbf16, #tpu.memory_space<vmem>>, %arg3: memref<9x128x128xbf16, #tpu.memory_space<vmem>>, %arg4: memref<1x128xf32, #tpu.memory_space<vmem>>, %arg5: memref<1x32x128xbf16, #tpu.memory_space<vmem>>) attributes {dimension_semantics = [#tpu.dimension_semantics<parallel>, #tpu.dimension_semantics<parallel>], iteration_bounds = array<i64: 2, 2>, scalar_prefetch = 0 : i64, scratch_operands = 0 : i64, tpu.core_type = #tpu.core_type<tc>, window_params = [{transform_indices = @transform_0, window_bounds = array<i64: 1, 4, 9, 16, 128>}, {pipeline_mode = #tpu.pipeline_mode<synchronous>, transform_indices = @transform_1, window_bounds = array<i64: 9, 128, 128>}, {pipeline_mode = #tpu.pipeline_mode<synchronous>, transform_indices = @transform_2, window_bounds = array<i64: 1, 128>}, {transform_indices = @transform_3, window_bounds = array<i64: 1, 32, 128>}]} {
    %c4_i32 = arith.constant 4 : i32
    %0 = arith.muli %arg1, %c4_i32 : i32
    %c0_i32 = arith.constant 0 : i32
    %1 = arith.addi %0, %c0_i32 : i32
    %c0 = arith.constant 0 : index
    %c0_0 = arith.constant 0 : index
    %2 = arith.index_cast %1 : i32 to index
    %c0_1 = arith.constant 0 : index
    %c0_2 = arith.constant 0 : index
    %3 = vector.load %arg2[%c0, %c0_0, %2, %c0_1, %c0_2] : memref<1x4x9x16x128xbf16, #tpu.memory_space<vmem>>, vector<1x1x4x8x128xbf16>
    %4 = vector.shape_cast %3 : vector<1x1x4x8x128xbf16> to vector<4x8x128xbf16>
    %5 = vector.shape_cast %4 : vector<4x8x128xbf16> to vector<32x128xbf16>
    %c0_3 = arith.constant 0 : index
    %c0_4 = arith.constant 0 : index
    %c0_5 = arith.constant 0 : index
    %6 = vector.load %arg3[%c0_3, %c0_4, %c0_5] : memref<9x128x128xbf16, #tpu.memory_space<vmem>>, vector<1x128x128xbf16>
    %7 = vector.shape_cast %6 : vector<1x128x128xbf16> to vector<128x128xbf16>
    %cst = arith.constant dense<0.000000e+00> : vector<32x128xf32>
    %8 = tpu.matmul %5, %7, %cst {dimension_numbers = #tpu.dot_dimension_numbers<[1], [0], [0], [1], [0, 0, 1, 1], [], []>} : vector<32x128xbf16>, vector<128x128xbf16>, vector<32x128xf32> -> vector<32x128xf32>
    %c0_i32_6 = arith.constant 0 : i32
    %9 = arith.addi %0, %c0_i32_6 : i32
    %c0_7 = arith.constant 0 : index
    %c1 = arith.constant 1 : index
    %10 = arith.index_cast %9 : i32 to index
    %c0_8 = arith.constant 0 : index
    %c0_9 = arith.constant 0 : index
    %11 = vector.load %arg2[%c0_7, %c1, %10, %c0_8, %c0_9] : memref<1x4x9x16x128xbf16, #tpu.memory_space<vmem>>, vector<1x1x4x8x128xbf16>
    %12 = vector.shape_cast %11 : vector<1x1x4x8x128xbf16> to vector<4x8x128xbf16>
    %13 = vector.shape_cast %12 : vector<4x8x128xbf16> to vector<32x128xbf16>
    %c1_10 = arith.constant 1 : index
    %c0_11 = arith.constant 0 : index
    %c0_12 = arith.constant 0 : index
    %14 = vector.load %arg3[%c1_10, %c0_11, %c0_12] : memref<9x128x128xbf16, #tpu.memory_space<vmem>>, vector<1x128x128xbf16>
    %15 = vector.shape_cast %14 : vector<1x128x128xbf16> to vector<128x128xbf16>
    %cst_13 = arith.constant dense<0.000000e+00> : vector<32x128xf32>
    %16 = tpu.matmul %13, %15, %cst_13 {dimension_numbers = #tpu.dot_dimension_numbers<[1], [0], [0], [1], [0, 0, 1, 1], [], []>} : vector<32x128xbf16>, vector<128x128xbf16>, vector<32x128xf32> -> vector<32x128xf32>
    %17 = arith.addf %8, %16 : vector<32x128xf32>
    %c0_i32_14 = arith.constant 0 : i32
    %18 = arith.addi %0, %c0_i32_14 : i32
    %c0_15 = arith.constant 0 : index
    %c0_16 = arith.constant 0 : index
    %19 = arith.index_cast %18 : i32 to index
    %c1_17 = arith.constant 1 : index
    %c0_18 = arith.constant 0 : index
    %20 = vector.load %arg2[%c0_15, %c0_16, %19, %c1_17, %c0_18] : memref<1x4x9x16x128xbf16, #tpu.memory_space<vmem>>, vector<1x1x4x8x128xbf16>
    %21 = vector.shape_cast %20 : vector<1x1x4x8x128xbf16> to vector<4x8x128xbf16>
    %22 = vector.shape_cast %21 : vector<4x8x128xbf16> to vector<32x128xbf16>
    %c2 = arith.constant 2 : index
    %c0_19 = arith.constant 0 : index
    %c0_20 = arith.constant 0 : index
    %23 = vector.load %arg3[%c2, %c0_19, %c0_20] : memref<9x128x128xbf16, #tpu.memory_space<vmem>>, vector<1x128x128xbf16>
    %24 = vector.shape_cast %23 : vector<1x128x128xbf16> to vector<128x128xbf16>
    %cst_21 = arith.constant dense<0.000000e+00> : vector<32x128xf32>
    %25 = tpu.matmul %22, %24, %cst_21 {dimension_numbers = #tpu.dot_dimension_numbers<[1], [0], [0], [1], [0, 0, 1, 1], [], []>} : vector<32x128xbf16>, vector<128x128xbf16>, vector<32x128xf32> -> vector<32x128xf32>
    %26 = arith.addf %17, %25 : vector<32x128xf32>
    %c0_i32_22 = arith.constant 0 : i32
    %27 = arith.addi %0, %c0_i32_22 : i32
    %c0_23 = arith.constant 0 : index
    %c2_24 = arith.constant 2 : index
    %28 = arith.index_cast %27 : i32 to index
    %c0_25 = arith.constant 0 : index
    %c0_26 = arith.constant 0 : index
    %29 = vector.load %arg2[%c0_23, %c2_24, %28, %c0_25, %c0_26] : memref<1x4x9x16x128xbf16, #tpu.memory_space<vmem>>, vector<1x1x4x8x128xbf16>
    %30 = vector.shape_cast %29 : vector<1x1x4x8x128xbf16> to vector<4x8x128xbf16>
    %31 = vector.shape_cast %30 : vector<4x8x128xbf16> to vector<32x128xbf16>
    %c3 = arith.constant 3 : index
    %c0_27 = arith.constant 0 : index
    %c0_28 = arith.constant 0 : index
    %32 = vector.load %arg3[%c3, %c0_27, %c0_28] : memref<9x128x128xbf16, #tpu.memory_space<vmem>>, vector<1x128x128xbf16>
    %33 = vector.shape_cast %32 : vector<1x128x128xbf16> to vector<128x128xbf16>
    %cst_29 = arith.constant dense<0.000000e+00> : vector<32x128xf32>
    %34 = tpu.matmul %31, %33, %cst_29 {dimension_numbers = #tpu.dot_dimension_numbers<[1], [0], [0], [1], [0, 0, 1, 1], [], []>} : vector<32x128xbf16>, vector<128x128xbf16>, vector<32x128xf32> -> vector<32x128xf32>
    %35 = arith.addf %26, %34 : vector<32x128xf32>
    %c0_i32_30 = arith.constant 0 : i32
    %36 = arith.addi %0, %c0_i32_30 : i32
    %c0_31 = arith.constant 0 : index
    %c3_32 = arith.constant 3 : index
    %37 = arith.index_cast %36 : i32 to index
    %c0_33 = arith.constant 0 : index
    %c0_34 = arith.constant 0 : index
    %38 = vector.load %arg2[%c0_31, %c3_32, %37, %c0_33, %c0_34] : memref<1x4x9x16x128xbf16, #tpu.memory_space<vmem>>, vector<1x1x4x8x128xbf16>
    %39 = vector.shape_cast %38 : vector<1x1x4x8x128xbf16> to vector<4x8x128xbf16>
    %40 = vector.shape_cast %39 : vector<4x8x128xbf16> to vector<32x128xbf16>
    %c4 = arith.constant 4 : index
    %c0_35 = arith.constant 0 : index
    %c0_36 = arith.constant 0 : index
    %41 = vector.load %arg3[%c4, %c0_35, %c0_36] : memref<9x128x128xbf16, #tpu.memory_space<vmem>>, vector<1x128x128xbf16>
    %42 = vector.shape_cast %41 : vector<1x128x128xbf16> to vector<128x128xbf16>
    %cst_37 = arith.constant dense<0.000000e+00> : vector<32x128xf32>
    %43 = tpu.matmul %40, %42, %cst_37 {dimension_numbers = #tpu.dot_dimension_numbers<[1], [0], [0], [1], [0, 0, 1, 1], [], []>} : vector<32x128xbf16>, vector<128x128xbf16>, vector<32x128xf32> -> vector<32x128xf32>
    %44 = arith.addf %35, %43 : vector<32x128xf32>
    %c0_i32_38 = arith.constant 0 : i32
    %45 = arith.addi %0, %c0_i32_38 : i32
    %c0_39 = arith.constant 0 : index
    %c2_40 = arith.constant 2 : index
    %46 = arith.index_cast %45 : i32 to index
    %c1_41 = arith.constant 1 : index
    %c0_42 = arith.constant 0 : index
    %47 = vector.load %arg2[%c0_39, %c2_40, %46, %c1_41, %c0_42] : memref<1x4x9x16x128xbf16, #tpu.memory_space<vmem>>, vector<1x1x4x8x128xbf16>
    %48 = vector.shape_cast %47 : vector<1x1x4x8x128xbf16> to vector<4x8x128xbf16>
    %49 = vector.shape_cast %48 : vector<4x8x128xbf16> to vector<32x128xbf16>
    %c5 = arith.constant 5 : index
    %c0_43 = arith.constant 0 : index
    %c0_44 = arith.constant 0 : index
    %50 = vector.load %arg3[%c5, %c0_43, %c0_44] : memref<9x128x128xbf16, #tpu.memory_space<vmem>>, vector<1x128x128xbf16>
    %51 = vector.shape_cast %50 : vector<1x128x128xbf16> to vector<128x128xbf16>
    %cst_45 = arith.constant dense<0.000000e+00> : vector<32x128xf32>
    %52 = tpu.matmul %49, %51, %cst_45 {dimension_numbers = #tpu.dot_dimension_numbers<[1], [0], [0], [1], [0, 0, 1, 1], [], []>} : vector<32x128xbf16>, vector<128x128xbf16>, vector<32x128xf32> -> vector<32x128xf32>
    %53 = arith.addf %44, %52 : vector<32x128xf32>
    %c1_i32 = arith.constant 1 : i32
    %54 = arith.addi %0, %c1_i32 : i32
    %c0_46 = arith.constant 0 : index
    %c0_47 = arith.constant 0 : index
    %55 = arith.index_cast %54 : i32 to index
    %c0_48 = arith.constant 0 : index
    %c0_49 = arith.constant 0 : index
    %56 = vector.load %arg2[%c0_46, %c0_47, %55, %c0_48, %c0_49] : memref<1x4x9x16x128xbf16, #tpu.memory_space<vmem>>, vector<1x1x4x8x128xbf16>
    %57 = vector.shape_cast %56 : vector<1x1x4x8x128xbf16> to vector<4x8x128xbf16>
    %58 = vector.shape_cast %57 : vector<4x8x128xbf16> to vector<32x128xbf16>
    %c6 = arith.constant 6 : index
    %c0_50 = arith.constant 0 : index
    %c0_51 = arith.constant 0 : index
    %59 = vector.load %arg3[%c6, %c0_50, %c0_51] : memref<9x128x128xbf16, #tpu.memory_space<vmem>>, vector<1x128x128xbf16>
    %60 = vector.shape_cast %59 : vector<1x128x128xbf16> to vector<128x128xbf16>
    %cst_52 = arith.constant dense<0.000000e+00> : vector<32x128xf32>
    %61 = tpu.matmul %58, %60, %cst_52 {dimension_numbers = #tpu.dot_dimension_numbers<[1], [0], [0], [1], [0, 0, 1, 1], [], []>} : vector<32x128xbf16>, vector<128x128xbf16>, vector<32x128xf32> -> vector<32x128xf32>
    %62 = arith.addf %53, %61 : vector<32x128xf32>
    %c1_i32_53 = arith.constant 1 : i32
    %63 = arith.addi %0, %c1_i32_53 : i32
    %c0_54 = arith.constant 0 : index
    %c1_55 = arith.constant 1 : index
    %64 = arith.index_cast %63 : i32 to index
    %c0_56 = arith.constant 0 : index
    %c0_57 = arith.constant 0 : index
    %65 = vector.load %arg2[%c0_54, %c1_55, %64, %c0_56, %c0_57] : memref<1x4x9x16x128xbf16, #tpu.memory_space<vmem>>, vector<1x1x4x8x128xbf16>
    %66 = vector.shape_cast %65 : vector<1x1x4x8x128xbf16> to vector<4x8x128xbf16>
    %67 = vector.shape_cast %66 : vector<4x8x128xbf16> to vector<32x128xbf16>
    %c7 = arith.constant 7 : index
    %c0_58 = arith.constant 0 : index
    %c0_59 = arith.constant 0 : index
    %68 = vector.load %arg3[%c7, %c0_58, %c0_59] : memref<9x128x128xbf16, #tpu.memory_space<vmem>>, vector<1x128x128xbf16>
    %69 = vector.shape_cast %68 : vector<1x128x128xbf16> to vector<128x128xbf16>
    %cst_60 = arith.constant dense<0.000000e+00> : vector<32x128xf32>
    %70 = tpu.matmul %67, %69, %cst_60 {dimension_numbers = #tpu.dot_dimension_numbers<[1], [0], [0], [1], [0, 0, 1, 1], [], []>} : vector<32x128xbf16>, vector<128x128xbf16>, vector<32x128xf32> -> vector<32x128xf32>
    %71 = arith.addf %62, %70 : vector<32x128xf32>
    %c1_i32_61 = arith.constant 1 : i32
    %72 = arith.addi %0, %c1_i32_61 : i32
    %c0_62 = arith.constant 0 : index
    %c0_63 = arith.constant 0 : index
    %73 = arith.index_cast %72 : i32 to index
    %c1_64 = arith.constant 1 : index
    %c0_65 = arith.constant 0 : index
    %74 = vector.load %arg2[%c0_62, %c0_63, %73, %c1_64, %c0_65] : memref<1x4x9x16x128xbf16, #tpu.memory_space<vmem>>, vector<1x1x4x8x128xbf16>
    %75 = vector.shape_cast %74 : vector<1x1x4x8x128xbf16> to vector<4x8x128xbf16>
    %76 = vector.shape_cast %75 : vector<4x8x128xbf16> to vector<32x128xbf16>
    %c8 = arith.constant 8 : index
    %c0_66 = arith.constant 0 : index
    %c0_67 = arith.constant 0 : index
    %77 = vector.load %arg3[%c8, %c0_66, %c0_67] : memref<9x128x128xbf16, #tpu.memory_space<vmem>>, vector<1x128x128xbf16>
    %78 = vector.shape_cast %77 : vector<1x128x128xbf16> to vector<128x128xbf16>
    %cst_68 = arith.constant dense<0.000000e+00> : vector<32x128xf32>
    %79 = tpu.matmul %76, %78, %cst_68 {dimension_numbers = #tpu.dot_dimension_numbers<[1], [0], [0], [1], [0, 0, 1, 1], [], []>} : vector<32x128xbf16>, vector<128x128xbf16>, vector<32x128xf32> -> vector<32x128xf32>
    %80 = arith.addf %71, %79 : vector<32x128xf32>
    %c0_69 = arith.constant 0 : index
    %c0_70 = arith.constant 0 : index
    %81 = vector.load %arg4[%c0_69, %c0_70] : memref<1x128xf32, #tpu.memory_space<vmem>>, vector<1x128xf32>
    %82 = vector.broadcast %81 : vector<1x128xf32> to vector<32x128xf32>
    %83 = arith.addf %80, %82 : vector<32x128xf32>
    %cst_71 = arith.constant 0.000000e+00 : f32
    %84 = vector.broadcast %cst_71 : f32 to vector<32x128xf32>
    %85 = arith.maximumf %83, %84 : vector<32x128xf32>
    %86 = arith.truncf %85 : vector<32x128xf32> to vector<32x128xbf16>
    %c0_72 = arith.constant 0 : index
    %c0_73 = arith.constant 0 : index
    %c0_74 = arith.constant 0 : index
    %87 = vector.load %arg5[%c0_72, %c0_73, %c0_74] : memref<1x32x128xbf16, #tpu.memory_space<vmem>>, vector<1x32x128xbf16>
    %88 = vector.shape_cast %87 : vector<1x32x128xbf16> to vector<32x128xbf16>
    %89 = vector.shape_cast %86 : vector<32x128xbf16> to vector<1x32x128xbf16>
    tpu.vector_store %arg5[%c0_72, %c0_73, %c0_74], %89 {strides = array<i32>} : memref<1x32x128xbf16, #tpu.memory_space<vmem>>, vector<1x32x128xbf16>,
    return
  }
  func.func @transform_0(%arg0: i32, %arg1: i32) -> (i32, i32, i32, i32, i32) {
    %c0_i32 = arith.constant 0 : i32
    %c0_i32_0 = arith.constant 0 : i32
    %c0_i32_1 = arith.constant 0 : i32
    %c0_i32_2 = arith.constant 0 : i32
    %c0_i32_3 = arith.constant 0 : i32
    return %arg0, %c0_i32, %c0_i32_0, %c0_i32_1, %c0_i32_2 : i32, i32, i32, i32, i32
  }
  func.func @transform_1(%arg0: i32, %arg1: i32) -> (i32, i32, i32) {
    %c0_i32 = arith.constant 0 : i32
    %c0_i32_0 = arith.constant 0 : i32
    %c0_i32_1 = arith.constant 0 : i32
    %c0_i32_2 = arith.constant 0 : i32
    return %c0_i32, %c0_i32_0, %c0_i32_1 : i32, i32, i32
  }
  func.func @transform_2(%arg0: i32, %arg1: i32) -> (i32, i32) {
    %c0_i32 = arith.constant 0 : i32
    %c0_i32_0 = arith.constant 0 : i32
    %c0_i32_1 = arith.constant 0 : i32
    return %c0_i32, %c0_i32_0 : i32, i32
  }
  func.func @transform_3(%arg0: i32, %arg1: i32) -> (i32, i32, i32) {
    %c0_i32 = arith.constant 0 : i32
    %c0_i32_0 = arith.constant 0 : i32
    return %arg0, %arg1, %c0_i32 : i32, i32, i32
  }
}

module attributes {stable_mosaic.version = 11 : i64} {
  func.func @_conv_bn_relu_kernel(%arg0: i32, %arg1: i32, %arg2: memref<1x1x10x16x128xbf16, #tpu.memory_space<vmem>>, %arg3: memref<9x128x128xbf16, #tpu.memory_space<vmem>>, %arg4: memref<1x128xf32, #tpu.memory_space<vmem>>, %arg5: memref<1x32x128xf32, #tpu.memory_space<vmem>>) attributes {dimension_semantics = [#tpu.dimension_semantics<parallel>, #tpu.dimension_semantics<parallel>], iteration_bounds = array<i64: 2, 2>, scalar_prefetch = 0 : i64, scratch_operands = 0 : i64, tpu.core_type = #tpu.core_type<tc>, window_params = [{transform_indices = @transform_0, window_bounds = array<i64: 1, 1, 10, 16, 128>}, {pipeline_mode = #tpu.pipeline_mode<synchronous>, transform_indices = @transform_1, window_bounds = array<i64: 9, 128, 128>}, {pipeline_mode = #tpu.pipeline_mode<synchronous>, transform_indices = @transform_2, window_bounds = array<i64: 1, 128>}, {transform_indices = @transform_3, window_bounds = array<i64: 1, 32, 128>}]} {
    %c4_i32 = arith.constant 4 : i32
    %0 = arith.muli %arg1, %c4_i32 : i32
    %c0_i32 = arith.constant 0 : i32
    %1 = arith.addi %0, %c0_i32 : i32
    %c0 = arith.constant 0 : index
    %c0_0 = arith.constant 0 : index
    %2 = arith.index_cast %1 : i32 to index
    %c0_1 = arith.constant 0 : index
    %c0_2 = arith.constant 0 : index
    %3 = vector.load %arg2[%c0, %c0_0, %2, %c0_1, %c0_2] : memref<1x1x10x16x128xbf16, #tpu.memory_space<vmem>>, vector<1x1x4x8x128xbf16>
    %4 = vector.shape_cast %3 : vector<1x1x4x8x128xbf16> to vector<4x8x128xbf16>
    %5 = vector.shape_cast %4 : vector<4x8x128xbf16> to vector<32x128xbf16>
    %c0_3 = arith.constant 0 : index
    %c0_4 = arith.constant 0 : index
    %c0_5 = arith.constant 0 : index
    %6 = vector.load %arg3[%c0_3, %c0_4, %c0_5] : memref<9x128x128xbf16, #tpu.memory_space<vmem>>, vector<1x128x128xbf16>
    %7 = vector.shape_cast %6 : vector<1x128x128xbf16> to vector<128x128xbf16>
    %cst = arith.constant dense<0.000000e+00> : vector<32x128xf32>
    %8 = tpu.matmul %5, %7, %cst {dimension_numbers = #tpu.dot_dimension_numbers<[1], [0], [0], [1], [0, 0, 1, 1], [], []>} : vector<32x128xbf16>, vector<128x128xbf16>, vector<32x128xf32> -> vector<32x128xf32>
    %c0_i32_6 = arith.constant 0 : i32
    %9 = arith.addi %0, %c0_i32_6 : i32
    %c0_7 = arith.constant 0 : index
    %c0_8 = arith.constant 0 : index
    %10 = arith.index_cast %9 : i32 to index
    %c1 = arith.constant 1 : index
    %c0_9 = arith.constant 0 : index
    %11 = vector.load %arg2[%c0_7, %c0_8, %10, %c1, %c0_9] : memref<1x1x10x16x128xbf16, #tpu.memory_space<vmem>>, vector<1x1x4x8x128xbf16>
    %12 = vector.shape_cast %11 : vector<1x1x4x8x128xbf16> to vector<4x8x128xbf16>
    %13 = vector.shape_cast %12 : vector<4x8x128xbf16> to vector<32x128xbf16>
    %c1_10 = arith.constant 1 : index
    %c0_11 = arith.constant 0 : index
    %c0_12 = arith.constant 0 : index
    %14 = vector.load %arg3[%c1_10, %c0_11, %c0_12] : memref<9x128x128xbf16, #tpu.memory_space<vmem>>, vector<1x128x128xbf16>
    %15 = vector.shape_cast %14 : vector<1x128x128xbf16> to vector<128x128xbf16>
    %cst_13 = arith.constant dense<0.000000e+00> : vector<32x128xf32>
    %16 = tpu.matmul %13, %15, %cst_13 {dimension_numbers = #tpu.dot_dimension_numbers<[1], [0], [0], [1], [0, 0, 1, 1], [], []>} : vector<32x128xbf16>, vector<128x128xbf16>, vector<32x128xf32> -> vector<32x128xf32>
    %17 = arith.addf %8, %16 : vector<32x128xf32>
    %c0_i32_14 = arith.constant 0 : i32
    %18 = arith.addi %0, %c0_i32_14 : i32
    %c0_15 = arith.constant 0 : index
    %c0_16 = arith.constant 0 : index
    %19 = arith.index_cast %18 : i32 to index
    %c2 = arith.constant 2 : index
    %c0_17 = arith.constant 0 : index
    %20 = vector.load %arg2[%c0_15, %c0_16, %19, %c2, %c0_17] : memref<1x1x10x16x128xbf16, #tpu.memory_space<vmem>>, vector<1x1x4x8x128xbf16>
    %21 = vector.shape_cast %20 : vector<1x1x4x8x128xbf16> to vector<4x8x128xbf16>
    %22 = vector.shape_cast %21 : vector<4x8x128xbf16> to vector<32x128xbf16>
    %c2_18 = arith.constant 2 : index
    %c0_19 = arith.constant 0 : index
    %c0_20 = arith.constant 0 : index
    %23 = vector.load %arg3[%c2_18, %c0_19, %c0_20] : memref<9x128x128xbf16, #tpu.memory_space<vmem>>, vector<1x128x128xbf16>
    %24 = vector.shape_cast %23 : vector<1x128x128xbf16> to vector<128x128xbf16>
    %cst_21 = arith.constant dense<0.000000e+00> : vector<32x128xf32>
    %25 = tpu.matmul %22, %24, %cst_21 {dimension_numbers = #tpu.dot_dimension_numbers<[1], [0], [0], [1], [0, 0, 1, 1], [], []>} : vector<32x128xbf16>, vector<128x128xbf16>, vector<32x128xf32> -> vector<32x128xf32>
    %26 = arith.addf %17, %25 : vector<32x128xf32>
    %c1_i32 = arith.constant 1 : i32
    %27 = arith.addi %0, %c1_i32 : i32
    %c0_22 = arith.constant 0 : index
    %c0_23 = arith.constant 0 : index
    %28 = arith.index_cast %27 : i32 to index
    %c0_24 = arith.constant 0 : index
    %c0_25 = arith.constant 0 : index
    %29 = vector.load %arg2[%c0_22, %c0_23, %28, %c0_24, %c0_25] : memref<1x1x10x16x128xbf16, #tpu.memory_space<vmem>>, vector<1x1x4x8x128xbf16>
    %30 = vector.shape_cast %29 : vector<1x1x4x8x128xbf16> to vector<4x8x128xbf16>
    %31 = vector.shape_cast %30 : vector<4x8x128xbf16> to vector<32x128xbf16>
    %c3 = arith.constant 3 : index
    %c0_26 = arith.constant 0 : index
    %c0_27 = arith.constant 0 : index
    %32 = vector.load %arg3[%c3, %c0_26, %c0_27] : memref<9x128x128xbf16, #tpu.memory_space<vmem>>, vector<1x128x128xbf16>
    %33 = vector.shape_cast %32 : vector<1x128x128xbf16> to vector<128x128xbf16>
    %cst_28 = arith.constant dense<0.000000e+00> : vector<32x128xf32>
    %34 = tpu.matmul %31, %33, %cst_28 {dimension_numbers = #tpu.dot_dimension_numbers<[1], [0], [0], [1], [0, 0, 1, 1], [], []>} : vector<32x128xbf16>, vector<128x128xbf16>, vector<32x128xf32> -> vector<32x128xf32>
    %35 = arith.addf %26, %34 : vector<32x128xf32>
    %c1_i32_29 = arith.constant 1 : i32
    %36 = arith.addi %0, %c1_i32_29 : i32
    %c0_30 = arith.constant 0 : index
    %c0_31 = arith.constant 0 : index
    %37 = arith.index_cast %36 : i32 to index
    %c1_32 = arith.constant 1 : index
    %c0_33 = arith.constant 0 : index
    %38 = vector.load %arg2[%c0_30, %c0_31, %37, %c1_32, %c0_33] : memref<1x1x10x16x128xbf16, #tpu.memory_space<vmem>>, vector<1x1x4x8x128xbf16>
    %39 = vector.shape_cast %38 : vector<1x1x4x8x128xbf16> to vector<4x8x128xbf16>
    %40 = vector.shape_cast %39 : vector<4x8x128xbf16> to vector<32x128xbf16>
    %c4 = arith.constant 4 : index
    %c0_34 = arith.constant 0 : index
    %c0_35 = arith.constant 0 : index
    %41 = vector.load %arg3[%c4, %c0_34, %c0_35] : memref<9x128x128xbf16, #tpu.memory_space<vmem>>, vector<1x128x128xbf16>
    %42 = vector.shape_cast %41 : vector<1x128x128xbf16> to vector<128x128xbf16>
    %cst_36 = arith.constant dense<0.000000e+00> : vector<32x128xf32>
    %43 = tpu.matmul %40, %42, %cst_36 {dimension_numbers = #tpu.dot_dimension_numbers<[1], [0], [0], [1], [0, 0, 1, 1], [], []>} : vector<32x128xbf16>, vector<128x128xbf16>, vector<32x128xf32> -> vector<32x128xf32>
    %44 = arith.addf %35, %43 : vector<32x128xf32>
    %c1_i32_37 = arith.constant 1 : i32
    %45 = arith.addi %0, %c1_i32_37 : i32
    %c0_38 = arith.constant 0 : index
    %c0_39 = arith.constant 0 : index
    %46 = arith.index_cast %45 : i32 to index
    %c2_40 = arith.constant 2 : index
    %c0_41 = arith.constant 0 : index
    %47 = vector.load %arg2[%c0_38, %c0_39, %46, %c2_40, %c0_41] : memref<1x1x10x16x128xbf16, #tpu.memory_space<vmem>>, vector<1x1x4x8x128xbf16>
    %48 = vector.shape_cast %47 : vector<1x1x4x8x128xbf16> to vector<4x8x128xbf16>
    %49 = vector.shape_cast %48 : vector<4x8x128xbf16> to vector<32x128xbf16>
    %c5 = arith.constant 5 : index
    %c0_42 = arith.constant 0 : index
    %c0_43 = arith.constant 0 : index
    %50 = vector.load %arg3[%c5, %c0_42, %c0_43] : memref<9x128x128xbf16, #tpu.memory_space<vmem>>, vector<1x128x128xbf16>
    %51 = vector.shape_cast %50 : vector<1x128x128xbf16> to vector<128x128xbf16>
    %cst_44 = arith.constant dense<0.000000e+00> : vector<32x128xf32>
    %52 = tpu.matmul %49, %51, %cst_44 {dimension_numbers = #tpu.dot_dimension_numbers<[1], [0], [0], [1], [0, 0, 1, 1], [], []>} : vector<32x128xbf16>, vector<128x128xbf16>, vector<32x128xf32> -> vector<32x128xf32>
    %53 = arith.addf %44, %52 : vector<32x128xf32>
    %c2_i32 = arith.constant 2 : i32
    %54 = arith.addi %0, %c2_i32 : i32
    %c0_45 = arith.constant 0 : index
    %c0_46 = arith.constant 0 : index
    %55 = arith.index_cast %54 : i32 to index
    %c0_47 = arith.constant 0 : index
    %c0_48 = arith.constant 0 : index
    %56 = vector.load %arg2[%c0_45, %c0_46, %55, %c0_47, %c0_48] : memref<1x1x10x16x128xbf16, #tpu.memory_space<vmem>>, vector<1x1x4x8x128xbf16>
    %57 = vector.shape_cast %56 : vector<1x1x4x8x128xbf16> to vector<4x8x128xbf16>
    %58 = vector.shape_cast %57 : vector<4x8x128xbf16> to vector<32x128xbf16>
    %c6 = arith.constant 6 : index
    %c0_49 = arith.constant 0 : index
    %c0_50 = arith.constant 0 : index
    %59 = vector.load %arg3[%c6, %c0_49, %c0_50] : memref<9x128x128xbf16, #tpu.memory_space<vmem>>, vector<1x128x128xbf16>
    %60 = vector.shape_cast %59 : vector<1x128x128xbf16> to vector<128x128xbf16>
    %cst_51 = arith.constant dense<0.000000e+00> : vector<32x128xf32>
    %61 = tpu.matmul %58, %60, %cst_51 {dimension_numbers = #tpu.dot_dimension_numbers<[1], [0], [0], [1], [0, 0, 1, 1], [], []>} : vector<32x128xbf16>, vector<128x128xbf16>, vector<32x128xf32> -> vector<32x128xf32>
    %62 = arith.addf %53, %61 : vector<32x128xf32>
    %c2_i32_52 = arith.constant 2 : i32
    %63 = arith.addi %0, %c2_i32_52 : i32
    %c0_53 = arith.constant 0 : index
    %c0_54 = arith.constant 0 : index
    %64 = arith.index_cast %63 : i32 to index
    %c1_55 = arith.constant 1 : index
    %c0_56 = arith.constant 0 : index
    %65 = vector.load %arg2[%c0_53, %c0_54, %64, %c1_55, %c0_56] : memref<1x1x10x16x128xbf16, #tpu.memory_space<vmem>>, vector<1x1x4x8x128xbf16>
    %66 = vector.shape_cast %65 : vector<1x1x4x8x128xbf16> to vector<4x8x128xbf16>
    %67 = vector.shape_cast %66 : vector<4x8x128xbf16> to vector<32x128xbf16>
    %c7 = arith.constant 7 : index
    %c0_57 = arith.constant 0 : index
    %c0_58 = arith.constant 0 : index
    %68 = vector.load %arg3[%c7, %c0_57, %c0_58] : memref<9x128x128xbf16, #tpu.memory_space<vmem>>, vector<1x128x128xbf16>
    %69 = vector.shape_cast %68 : vector<1x128x128xbf16> to vector<128x128xbf16>
    %cst_59 = arith.constant dense<0.000000e+00> : vector<32x128xf32>
    %70 = tpu.matmul %67, %69, %cst_59 {dimension_numbers = #tpu.dot_dimension_numbers<[1], [0], [0], [1], [0, 0, 1, 1], [], []>} : vector<32x128xbf16>, vector<128x128xbf16>, vector<32x128xf32> -> vector<32x128xf32>
    %71 = arith.addf %62, %70 : vector<32x128xf32>
    %c2_i32_60 = arith.constant 2 : i32
    %72 = arith.addi %0, %c2_i32_60 : i32
    %c0_61 = arith.constant 0 : index
    %c0_62 = arith.constant 0 : index
    %73 = arith.index_cast %72 : i32 to index
    %c2_63 = arith.constant 2 : index
    %c0_64 = arith.constant 0 : index
    %74 = vector.load %arg2[%c0_61, %c0_62, %73, %c2_63, %c0_64] : memref<1x1x10x16x128xbf16, #tpu.memory_space<vmem>>, vector<1x1x4x8x128xbf16>
    %75 = vector.shape_cast %74 : vector<1x1x4x8x128xbf16> to vector<4x8x128xbf16>
    %76 = vector.shape_cast %75 : vector<4x8x128xbf16> to vector<32x128xbf16>
    %c8 = arith.constant 8 : index
    %c0_65 = arith.constant 0 : index
    %c0_66 = arith.constant 0 : index
    %77 = vector.load %arg3[%c8, %c0_65, %c0_66] : memref<9x128x128xbf16, #tpu.memory_space<vmem>>, vector<1x128x128xbf16>
    %78 = vector.shape_cast %77 : vector<1x128x128xbf16> to vector<128x128xbf16>
    %cst_67 = arith.constant dense<0.000000e+00> : vector<32x128xf32>
    %79 = tpu.matmul %76, %78, %cst_67 {dimension_numbers = #tpu.dot_dimension_numbers<[1], [0], [0], [1], [0, 0, 1, 1], [], []>} : vector<32x128xbf16>, vector<128x128xbf16>, vector<32x128xf32> -> vector<32x128xf32>
    %80 = arith.addf %71, %79 : vector<32x128xf32>
    %c0_68 = arith.constant 0 : index
    %c0_69 = arith.constant 0 : index
    %81 = vector.load %arg4[%c0_68, %c0_69] : memref<1x128xf32, #tpu.memory_space<vmem>>, vector<1x128xf32>
    %82 = vector.broadcast %81 : vector<1x128xf32> to vector<32x128xf32>
    %83 = arith.addf %80, %82 : vector<32x128xf32>
    %cst_70 = arith.constant 0.000000e+00 : f32
    %84 = vector.broadcast %cst_70 : f32 to vector<32x128xf32>
    %85 = arith.maximumf %83, %84 : vector<32x128xf32>
    %c0_71 = arith.constant 0 : index
    %c0_72 = arith.constant 0 : index
    %c0_73 = arith.constant 0 : index
    %86 = vector.load %arg5[%c0_71, %c0_72, %c0_73] : memref<1x32x128xf32, #tpu.memory_space<vmem>>, vector<1x32x128xf32>
    %87 = vector.shape_cast %86 : vector<1x32x128xf32> to vector<32x128xf32>
    %88 = vector.shape_cast %85 : vector<32x128xf32> to vector<1x32x128xf32>
    tpu.vector_store %arg5[%c0_71, %c0_72, %c0_73], %88 {strides = array<i32>} : memref<1x32x128xf32, #tpu.memory_space<vmem>>, vector<1x32x128xf32>,
    return
  }
  func.func @transform_0(%arg0: i32, %arg1: i32) -> (i32, i32, i32, i32, i32) {
    %c0_i32 = arith.constant 0 : i32
    %c0_i32_0 = arith.constant 0 : i32
    %c0_i32_1 = arith.constant 0 : i32
    %c0_i32_2 = arith.constant 0 : i32
    %c0_i32_3 = arith.constant 0 : i32
    return %arg0, %c0_i32, %c0_i32_0, %c0_i32_1, %c0_i32_2 : i32, i32, i32, i32, i32
  }
  func.func @transform_1(%arg0: i32, %arg1: i32) -> (i32, i32, i32) {
    %c0_i32 = arith.constant 0 : i32
    %c0_i32_0 = arith.constant 0 : i32
    %c0_i32_1 = arith.constant 0 : i32
    %c0_i32_2 = arith.constant 0 : i32
    return %c0_i32, %c0_i32_0, %c0_i32_1 : i32, i32, i32
  }
  func.func @transform_2(%arg0: i32, %arg1: i32) -> (i32, i32) {
    %c0_i32 = arith.constant 0 : i32
    %c0_i32_0 = arith.constant 0 : i32
    %c0_i32_1 = arith.constant 0 : i32
    return %c0_i32, %c0_i32_0 : i32, i32
  }
  func.func @transform_3(%arg0: i32, %arg1: i32) -> (i32, i32, i32) {
    %c0_i32 = arith.constant 0 : i32
    %c0_i32_0 = arith.constant 0 : i32
    return %arg0, %arg1, %c0_i32 : i32, i32, i32
  }
}

</mosaic_0001>

<llo_original>
// kernel: conv_block_forward.3
$region0: #{conv_block_forward.3}
  #allocation0 [shape = 'u32[]', space=smem, size = 0x4, offset = 0x4, fixed_abs, tag = 'smem constant byte address 0x4 - core index']
  #allocation1 [shape = 'u32[72,128]{1,0:T(1,128)}', space=vmem, size = 0x9000, scoped, tag = 'internal scratch']
  %s0 = inlined_call_operand.vmem [shape: bf16[2,1,10,16,128], index: 0, kind: input, shape index: {}]
  %s1 = inlined_call_operand.vmem [shape: bf16[9,128,128], index: 1, kind: input, shape index: {}]
  %s2 = inlined_call_operand.vmem [shape: f32[1,128], index: 2, kind: input, shape index: {}]
  %s3 = inlined_call_operand.vmem [shape: f32[2,64,128], index: 3, kind: output, shape index: {}]
  %s4 = sld [smem:[#allocation0]]
  $region45: #{conv_block_forward.3} parent=0
    _
  %s6 = ssub.s32 1, %s4
  %s7 = scalar_select 0, %s6, %s4
  loop: start=0, step=1, limit=6
  $region2: #{conv_block_forward.3} parent=0 // loop_pre_header
    _
  $region3: #{conv_block_forward.3} parent=0 // loop_header
    %s9 = sphi 0, %s13
    %p10 = scmp.ge.s32.totalorder %s9, 6
    %s16 = sphi 0, %s28
    %s17 = sphi 0, %s24
    %s18 = sphi 0, %s16
    %s19 = sphi 0, %s17
    %s20 = sphi 0, %s18
    %s21 = sphi 0, %s19
    %s31 = sphi 0, %s33
    %s34 = sphi 0, %s31
    %s35 = sphi 0, %s34
    %s51 = sphi 0, %s35
    %s55 = sphi 0, %s55
    %s57 = sphi 0, %s55
    %s58 = sphi 0, %s57
    %s72 = sphi 0, %s58
    %s76 = sphi 0, %s76
    %s78 = sphi 0, %s76
    %s79 = sphi 0, %s78
    %s93 = sphi 0, %s79
    %s101 = sphi 0, %s103
    %s104 = sphi 0, %s101
    %s105 = sphi 0, %s104
    %s121 = sphi 0, %s105
  $region4: #{conv_block_forward.3} parent=0 // loop_header_branch
    %12 = sbr.rel (%p10) target = $region8
  $region5: #{conv_block_forward.3} parent=0 // loop_body
    %s14 = ssub.s32 %s9, 1
    %s15 = ssub.s32 %s9, 2
    %s22 = sadd.s32 1, %s17
    %p23 = scmp.ge.s32.totalorder %s22, 2
    %s24 = scalar_select %p23, 0, %s22
    %s25 = sadd.s32 1, %s16
    %s26 = scalar_select %p23, %s25, %s16
    %p27 = scmp.ge.s32.totalorder %s26, 2
    %s28 = scalar_select %p27, 0, %s26
    %s29 = ssub.s32 %s16, %s28
    %p30 = scmp.eq.s32.totalorder %s29, 0
    %s32 = sadd.s32 %s31, 1
    %s33 = scalar_select %p30, %s31, %s32
    %p36 = pneg %p30
    %p37 = scmp.eq.s32.totalorder %s9, 3
    %p38 = por %p36, %p37
    %p39 = scmp.ne.s32.totalorder %s31, %s34
    %p40 = scmp.eq.s32.totalorder %s9, 0
    %p41 = por %p39, %p40
    %p42 = scmp.ne.s32.totalorder %s31, %s34
    %p43 = scmp.eq.s32.totalorder %s14, 3
    %p44 = por %p42, %p43
    %p45 = scmp.ne.s32.totalorder %s34, %s35
    %p46 = scmp.eq.s32.totalorder %s14, 0
    %p47 = por %p45, %p46
    %p48 = scmp.ne.s32.totalorder %s34, %s35
    %p49 = scmp.eq.s32.totalorder %s15, 3
    %p50 = por %p48, %p49
    %p52 = scmp.ne.s32.totalorder %s35, %s51
    %p53 = scmp.eq.s32.totalorder %s15, 0
    %p54 = por %p52, %p53
    %s56 = sadd.s32 %s55, 1
    %p59 = scmp.eq.s32.totalorder %s9, 3
    %p60 = scmp.ne.s32.totalorder %s55, %s57
    %p61 = scmp.eq.s32.totalorder %s9, 0
    %p62 = por %p60, %p61
    %p63 = scmp.ne.s32.totalorder %s55, %s57
    %p64 = scmp.eq.s32.totalorder %s14, 3
    %p65 = por %p63, %p64
    %p66 = scmp.ne.s32.totalorder %s57, %s58
    %p67 = scmp.eq.s32.totalorder %s14, 0
    %p68 = por %p66, %p67
    %p69 = scmp.ne.s32.totalorder %s57, %s58
    %p70 = scmp.eq.s32.totalorder %s15, 3
    %p71 = por %p69, %p70
    %p73 = scmp.ne.s32.totalorder %s58, %s72
    %p74 = scmp.eq.s32.totalorder %s15, 0
    %p75 = por %p73, %p74
    %s77 = sadd.s32 %s76, 1
    %p80 = scmp.eq.s32.totalorder %s9, 3
    %p81 = scmp.ne.s32.totalorder %s76, %s78
    %p82 = scmp.eq.s32.totalorder %s9, 0
    %p83 = por %p81, %p82
    %p84 = scmp.ne.s32.totalorder %s76, %s78
    %p85 = scmp.eq.s32.totalorder %s14, 3
    %p86 = por %p84, %p85
    %p87 = scmp.ne.s32.totalorder %s78, %s79
    %p88 = scmp.eq.s32.totalorder %s14, 0
    %p89 = por %p87, %p88
    %p90 = scmp.ne.s32.totalorder %s78, %s79
    %p91 = scmp.eq.s32.totalorder %s15, 3
    %p92 = por %p90, %p91
    %p94 = scmp.ne.s32.totalorder %s79, %s93
    %p95 = scmp.eq.s32.totalorder %s15, 0
    %p96 = por %p94, %p95
    %s97 = ssub.s32 %s16, %s28
    %s98 = ssub.s32 %s17, %s24
    %s99 = sor.u32 %s97, %s98
    %p100 = scmp.eq.s32.totalorder %s99, 0
    %s102 = sadd.s32 %s101, 1
    %s103 = scalar_select %p100, %s101, %s102
    %p106 = pneg %p100
    %p107 = scmp.eq.s32.totalorder %s9, 3
    %p108 = por %p106, %p107
    %p109 = scmp.ne.s32.totalorder %s101, %s104
    %p110 = scmp.eq.s32.totalorder %s9, 0
    %p111 = por %p109, %p110
    %p112 = scmp.ne.s32.totalorder %s101, %s104
    %p113 = scmp.eq.s32.totalorder %s14, 3
    %p114 = por %p112, %p113
    %p115 = scmp.ne.s32.totalorder %s104, %s105
    %p116 = scmp.eq.s32.totalorder %s14, 0
    %p117 = por %p115, %p116
    %p118 = scmp.ne.s32.totalorder %s104, %s105
    %p119 = scmp.eq.s32.totalorder %s15, 3
    %p120 = por %p118, %p119
    %p122 = scmp.ne.s32.totalorder %s105, %s121
    %p123 = scmp.eq.s32.totalorder %s15, 0
    %p124 = por %p122, %p123
    %p125 = scmp.le.s32.totalorder 1, %s9
    %p126 = scmp.lt.s32.totalorder %s9, 5
    %p127 = pnand %p125, %p126
    %p128 = pneg %p127
    // Predicated region
    $region9: #{conv_block_forward.3} parent=5 // pred_check
      _
    $region10: #{conv_block_forward.3} parent=5 // pred_check_branch
      %130 = sbr.rel (%p127) target = $region12
    $region11: #{conv_block_forward.3} parent=5 // pred_region
      %s131 = ssub.s32 %s9, 1
      // Predicated region
      $region13: #{conv_block_forward.3} parent=11 // pred_check
        %p132 = pneg %p68
      $region14: #{conv_block_forward.3} parent=11 // pred_check_branch
        %134 = sbr.rel (%p132) target = $region16
      $region15: #{conv_block_forward.3} parent=11 // pred_region
        _
      $region16: #{conv_block_forward.3} parent=11 // pred_fallthru
        _
      // Predicated region
      $region17: #{conv_block_forward.3} parent=11 // pred_check
        %p135 = pneg %p89
      $region18: #{conv_block_forward.3} parent=11 // pred_check_branch
        %137 = sbr.rel (%p135) target = $region20
      $region19: #{conv_block_forward.3} parent=11 // pred_region
        _
      $region20: #{conv_block_forward.3} parent=11 // pred_fallthru
        _
    $region12: #{conv_block_forward.3} parent=5 // pred_fallthru
      _
    %p138 = scmp.lt.s32.totalorder %s9, 4
    // Predicated region
    $region21: #{conv_block_forward.3} parent=5 // pred_check
      %p139 = pneg %p138
    $region22: #{conv_block_forward.3} parent=5 // pred_check_branch
      %141 = sbr.rel (%p139) target = $region24
    $region23: #{conv_block_forward.3} parent=5 // pred_region
      // Predicated region
      $region25: #{conv_block_forward.3} parent=23 // pred_check
        %p142 = pneg %p41
      $region26: #{conv_block_forward.3} parent=23 // pred_check_branch
        %144 = sbr.rel (%p142) target = $region28
      $region27: #{conv_block_forward.3} parent=23 // pred_region
        %p145 = scmp.lt.s32.totalorder %s16, 1
        %s146 = scalar_select %p145, %s16, 1
        %s147 = smul.addr %s146, 20
        %s148 = smul.addr %s147, 4
        %s149 = scalar_lea.vmem %s0, %s148
      $region28: #{conv_block_forward.3} parent=23 // pred_fallthru
        _
    $region24: #{conv_block_forward.3} parent=5 // pred_fallthru
      _
    %p150 = scmp.le.s32.totalorder 1, %s9
    %p151 = scmp.lt.s32.totalorder %s9, 5
    %p152 = pnand %p150, %p151
    %p153 = pneg %p152
    // Predicated region
    $region29: #{conv_block_forward.3} parent=5 // pred_check
      _
    $region30: #{conv_block_forward.3} parent=5 // pred_check_branch
      %155 = sbr.rel (%p152) target = $region32
    $region31: #{conv_block_forward.3} parent=5 // pred_region
      %s156 = ssub.s32 %s9, 1
      %p157 = scmp.lt.s32.totalorder %s18, 1
      %s158 = scalar_select %p157, %s18, 1
      %s159 = smul.addr %s158, 20
      %s160 = smul.addr %s159, 4
      %s161 = scalar_lea.vmem %s0, %s160
      %p162 = pneg %p47
      %p163 = pneg %p44
      %p164 = pneg %p68
      %p165 = pneg %p65
      %p166 = pneg %p89
      %p167 = pneg %p86
      %p168 = pneg %p117
      %p169 = pneg %p114
      %s170 = smul.u32 4, %s19
      %p171 = scmp.lt.s32.totalorder %s18, 1
      %s172 = scalar_select %p171, %s18, 1
      %p173 = scmp.lt.s32.totalorder %s170, 7
      %s174 = scalar_select %p173, %s170, 7
      %s175 = smul.addr %s172, 8
      %s176 = sadd.s32 %s174, %s175
      %s177 = smul.addr %s176, 8
      %s178 = scalar_lea.vmem %s3, %s177
      %p179 = scmp.lt.s32.totalorder %s18, 1
      %s180 = scalar_select %p179, %s18, 1
      %s181 = smul.addr %s180, 20
      %s182 = smul.addr %s181, 4
      %s183 = scalar_lea.vmem %s0, %s182
      %s184 = smul.u32 4, %s19
      %p185 = scmp.lt.s32.totalorder %s18, 1
      %s186 = scalar_select %p185, %s18, 1
      %p187 = scmp.lt.s32.totalorder %s184, 7
      %s188 = scalar_select %p187, %s184, 7
      %s189 = smul.addr %s186, 8
      %s190 = sadd.s32 %s188, %s189
      %s191 = smul.addr %s190, 8
      %s192 = scalar_lea.vmem %s3, %s191
      %s193 = smul.u32 4, %s19
      %s194 = smul.u32 %s19, 4
      %s195 = smul.u32 %s194, 2
      %s196 = smul.addr %s195, 4
      %s197 = scalar_lea.vmem %s183, %s196
      %v198 = vld [vmem:[%s197] sm:$0xf]
      %v199 = vld [vmem:[%s197 + $0x8] sm:$0xf]
      %v200 = vld [vmem:[%s197 + $0x10] sm:$0xf]
      %v201 = vld [vmem:[%s197 + $0x18] sm:$0xf]
      %v202 = vld [vmem:[%s1] sm:$0xf]
      %v203 = vld [vmem:[%s1 + $0x4] sm:$0xf]
      %v204 = vld [vmem:[%s1 + $0x8] sm:$0xf]
      %v205 = vld [vmem:[%s1 + $0xc] sm:$0xf]
      %v206 = vld [vmem:[%s1 + $0x10] sm:$0xf]
      %v207 = vld [vmem:[%s1 + $0x14] sm:$0xf]
      %v208 = vld [vmem:[%s1 + $0x18] sm:$0xf]
      %v209 = vld [vmem:[%s1 + $0x1c] sm:$0xf]
      %v210 = vld [vmem:[%s1 + $0x20] sm:$0xf]
      %v211 = vld [vmem:[%s1 + $0x24] sm:$0xf]
      %v212 = vld [vmem:[%s1 + $0x28] sm:$0xf]
      %v213 = vld [vmem:[%s1 + $0x2c] sm:$0xf]
      %v214 = vld [vmem:[%s1 + $0x30] sm:$0xf]
      %v215 = vld [vmem:[%s1 + $0x34] sm:$0xf]
      %v216 = vld [vmem:[%s1 + $0x38] sm:$0xf]
      %v217 = vld [vmem:[%s1 + $0x3c] sm:$0xf]
      %v218 = vld [vmem:[%s197 + $0x4] sm:$0x1]
      %v219 = vld [vmem:[%s197 + $0xc] sm:$0x1]
      %v220 = vld [vmem:[%s197 + $0x14] sm:$0x1]
      %v221 = vld [vmem:[%s197 + $0x1c] sm:$0x1]
      %vm222 = vsmask.f32 3328
      %vm223 = vsmask.f32 7440
      %vm224 = vmor %vm222, %vm223
      %v226 = vshrl.u32 %v198, 16
      %v228 = vrot.slane %v226, 4
      %v229 = vshll.u32 %v198, 16
      %v231 = vrot.slane %v229, 5
      %v232 = vor.u32 %v228, %v231
      %v233 = vrot.slane %v232, 4
      %v235 = vshll.u32 %v218, 16
      %v237 = vrot.slane %v235, 5
      %v238 = vsel %vm224, %v233, %v237
      %v240 = vshrl.u32 %v199, 16
      %v242 = vrot.slane %v240, 4
      %v243 = vshll.u32 %v199, 16
      %v245 = vrot.slane %v243, 5
      %v246 = vor.u32 %v242, %v245
      %v247 = vrot.slane %v246, 4
      %v249 = vshll.u32 %v219, 16
      %v251 = vrot.slane %v249, 5
      %v252 = vsel %vm224, %v247, %v251
      %v254 = vshrl.u32 %v200, 16
      %v256 = vrot.slane %v254, 4
      %v257 = vshll.u32 %v200, 16
      %v259 = vrot.slane %v257, 5
      %v260 = vor.u32 %v256, %v259
      %v261 = vrot.slane %v260, 4
      %v263 = vshll.u32 %v220, 16
      %v265 = vrot.slane %v263, 5
      %v266 = vsel %vm224, %v261, %v265
      %v268 = vshrl.u32 %v201, 16
      %v270 = vrot.slane %v268, 4
      %v271 = vshll.u32 %v201, 16
      %v273 = vrot.slane %v271, 5
      %v274 = vor.u32 %v270, %v273
      %v275 = vrot.slane %v274, 4
      %v277 = vshll.u32 %v221, 16
      %v279 = vrot.slane %v277, 5
      %v280 = vsel %vm224, %v275, %v279
      %s281 = scalar_lea.vmem %s1, 64
      %v282 = vld [vmem:[%s281] sm:$0xf]
      %v283 = vld [vmem:[%s281 + $0x4] sm:$0xf]
      %v284 = vld [vmem:[%s281 + $0x8] sm:$0xf]
      %v285 = vld [vmem:[%s281 + $0xc] sm:$0xf]
      %v286 = vld [vmem:[%s281 + $0x10] sm:$0xf]
      %v287 = vld [vmem:[%s281 + $0x14] sm:$0xf]
      %v288 = vld [vmem:[%s281 + $0x18] sm:$0xf]
      %v289 = vld [vmem:[%s281 + $0x1c] sm:$0xf]
      %v290 = vld [vmem:[%s281 + $0x20] sm:$0xf]
      %v291 = vld [vmem:[%s281 + $0x24] sm:$0xf]
      %v292 = vld [vmem:[%s281 + $0x28] sm:$0xf]
      %v293 = vld [vmem:[%s281 + $0x2c] sm:$0xf]
      %v294 = vld [vmem:[%s281 + $0x30] sm:$0xf]
      %v295 = vld [vmem:[%s281 + $0x34] sm:$0xf]
      %v296 = vld [vmem:[%s281 + $0x38] sm:$0xf]
      %v297 = vld [vmem:[%s281 + $0x3c] sm:$0xf]
      %v298 = vunpack.c.l.b16 %v238
      %v299 = vunpack.c.l.b16 %v252
      %v300 = vunpack.c.l.b16 %v266
      %v301 = vunpack.c.l.b16 %v280
      %v302 = vpack.c.b16 %v299, %v298
      %v303 = vpack.c.b16 %v301, %v300
      %v322 = vunpack.c.l.b16 %v282
      %v323 = vunpack.c.l.b16 %v283
      %v324 = vunpack.c.l.b16 %v284
      %v325 = vunpack.c.l.b16 %v285
      %v326 = vunpack.c.l.b16 %v286
      %v327 = vunpack.c.l.b16 %v287
      %v328 = vunpack.c.l.b16 %v288
      %v329 = vunpack.c.l.b16 %v289
      %v330 = vunpack.c.l.b16 %v290
      %v331 = vunpack.c.l.b16 %v291
      %v332 = vunpack.c.l.b16 %v292
      %v333 = vunpack.c.l.b16 %v293
      %v334 = vunpack.c.l.b16 %v294
      %v335 = vunpack.c.l.b16 %v295
      %v336 = vunpack.c.l.b16 %v296
      %v337 = vunpack.c.l.b16 %v297
      %v338 = vpack.c.b16 %v323, %v322
      %v339 = vpack.c.b16 %v325, %v324
      %v340 = vpack.c.b16 %v327, %v326
      %v341 = vpack.c.b16 %v329, %v328
      %v342 = vpack.c.b16 %v331, %v330
      %v343 = vpack.c.b16 %v333, %v332
      %v344 = vpack.c.b16 %v335, %v334
      %v345 = vpack.c.b16 %v337, %v336
      %354 = vmatpush.bf16.msra.mxu0 %v345
      %355 = vmatpush.bf16.msra.mxu0 %v344
      %356 = vmatpush.bf16.msra.mxu0 %v343
      %357 = vmatpush.bf16.msra.mxu0 %v342
      %358 = vmatpush.bf16.msra.mxu0 %v341
      %359 = vmatpush.bf16.msra.mxu0 %v340
      %360 = vmatpush.bf16.msra.mxu0 %v339
      %361 = vmatpush.bf16.msra.mxu0 %v338
      %362 = vmatmul.bf16.gmra.mxu0 %v302
      %v363 = vpop.f32.mrf.mxu0
      %v364 = vadd.f32 0.0, %v363
      %v365 = vpop.f32.mrf.mxu0
      %v366 = vadd.f32 0.0, %v365
      %367 = vmatmul.bf16.gmra.mxu0 %v303
      %v368 = vpop.f32.mrf.mxu0
      %v369 = vadd.f32 0.0, %v368
      %v370 = vpop.f32.mrf.mxu0
      %v371 = vadd.f32 0.0, %v370
      %372 = vdwg.mxu0
      %v377 = vunpack.c.l.b16 %v198
      %v378 = vunpack.c.l.b16 %v199
      %v379 = vunpack.c.l.b16 %v200
      %v380 = vunpack.c.l.b16 %v201
      %v381 = vpack.c.b16 %v378, %v377
      %v382 = vpack.c.b16 %v380, %v379
      %v401 = vunpack.c.l.b16 %v202
      %v402 = vunpack.c.l.b16 %v203
      %v403 = vunpack.c.l.b16 %v204
      %v404 = vunpack.c.l.b16 %v205
      %v405 = vunpack.c.l.b16 %v206
      %v406 = vunpack.c.l.b16 %v207
      %v407 = vunpack.c.l.b16 %v208
      %v408 = vunpack.c.l.b16 %v209
      %v409 = vunpack.c.l.b16 %v210
      %v410 = vunpack.c.l.b16 %v211
      %v411 = vunpack.c.l.b16 %v212
      %v412 = vunpack.c.l.b16 %v213
      %v413 = vunpack.c.l.b16 %v214
      %v414 = vunpack.c.l.b16 %v215
      %v415 = vunpack.c.l.b16 %v216
      %v416 = vunpack.c.l.b16 %v217
      %v417 = vpack.c.b16 %v402, %v401
      %v418 = vpack.c.b16 %v404, %v403
      %v419 = vpack.c.b16 %v406, %v405
      %v420 = vpack.c.b16 %v408, %v407
      %v421 = vpack.c.b16 %v410, %v409
      %v422 = vpack.c.b16 %v412, %v411
      %v423 = vpack.c.b16 %v414, %v413
      %v424 = vpack.c.b16 %v416, %v415
      %433 = vmatpush.bf16.msra.mxu0 %v424
      %434 = vmatpush.bf16.msra.mxu0 %v423
      %435 = vmatpush.bf16.msra.mxu0 %v422
      %436 = vmatpush.bf16.msra.mxu0 %v421
      %437 = vmatpush.bf16.msra.mxu0 %v420
      %438 = vmatpush.bf16.msra.mxu0 %v419
      %439 = vmatpush.bf16.msra.mxu0 %v418
      %440 = vmatpush.bf16.msra.mxu0 %v417
      %441 = vmatmul.bf16.gmra.mxu0 %v381
      %v442 = vpop.f32.mrf.mxu0
      %v443 = vadd.f32 %v364, %v442
      %v444 = vpop.f32.mrf.mxu0
      %v445 = vadd.f32 %v366, %v444
      %446 = vmatmul.bf16.gmra.mxu0 %v382
      %v447 = vpop.f32.mrf.mxu0
      %v448 = vadd.f32 %v369, %v447
      %v449 = vpop.f32.mrf.mxu0
      %v450 = vadd.f32 %v371, %v449
      %451 = vdwg.mxu0
      %v452 = vld [vmem:[%s197] sm:$0xe]
      %v453 = vld [vmem:[%s197 + $0x8] sm:$0xe]
      %v454 = vld [vmem:[%s197 + $0x10] sm:$0xe]
      %v455 = vld [vmem:[%s197 + $0x18] sm:$0xe]
      %vm464 = vcmask 1042432
      %vm465 = vcmask 1046532
      %vm466 = vmor %vm464, %vm465
      %v467 = vrot.slane %v452, 5
      %v468 = vrot.slane %v467, 4
      %v469 = vrot.slane %v218, 5
      %v470 = vsel %vm466, %v468, %v469
      %v471 = vrot.slane %v453, 5
      %v472 = vrot.slane %v471, 4
      %v473 = vrot.slane %v219, 5
      %v474 = vsel %vm466, %v472, %v473
      %v475 = vrot.slane %v454, 5
      %v476 = vrot.slane %v475, 4
      %v477 = vrot.slane %v220, 5
      %v478 = vsel %vm466, %v476, %v477
      %v479 = vrot.slane %v455, 5
      %v480 = vrot.slane %v479, 4
      %v481 = vrot.slane %v221, 5
      %v482 = vsel %vm466, %v480, %v481
      %s483 = scalar_lea.vmem %s1, 128
      %v484 = vld [vmem:[%s483] sm:$0xf]
      %v485 = vld [vmem:[%s483 + $0x4] sm:$0xf]
      %v486 = vld [vmem:[%s483 + $0x8] sm:$0xf]
      %v487 = vld [vmem:[%s483 + $0xc] sm:$0xf]
      %v488 = vld [vmem:[%s483 + $0x10] sm:$0xf]
      %v489 = vld [vmem:[%s483 + $0x14] sm:$0xf]
      %v490 = vld [vmem:[%s483 + $0x18] sm:$0xf]
      %v491 = vld [vmem:[%s483 + $0x1c] sm:$0xf]
      %v492 = vld [vmem:[%s483 + $0x20] sm:$0xf]
      %v493 = vld [vmem:[%s483 + $0x24] sm:$0xf]
      %v494 = vld [vmem:[%s483 + $0x28] sm:$0xf]
      %v495 = vld [vmem:[%s483 + $0x2c] sm:$0xf]
      %v496 = vld [vmem:[%s483 + $0x30] sm:$0xf]
      %v497 = vld [vmem:[%s483 + $0x34] sm:$0xf]
      %v498 = vld [vmem:[%s483 + $0x38] sm:$0xf]
      %v499 = vld [vmem:[%s483 + $0x3c] sm:$0xf]
      %v500 = vunpack.c.l.b16 %v470
      %v501 = vunpack.c.l.b16 %v474
      %v502 = vunpack.c.l.b16 %v478
      %v503 = vunpack.c.l.b16 %v482
      %v504 = vpack.c.b16 %v501, %v500
      %v505 = vpack.c.b16 %v503, %v502
      %v524 = vunpack.c.l.b16 %v484
      %v525 = vunpack.c.l.b16 %v485
      %v526 = vunpack.c.l.b16 %v486
      %v527 = vunpack.c.l.b16 %v487
      %v528 = vunpack.c.l.b16 %v488
      %v529 = vunpack.c.l.b16 %v489
      %v530 = vunpack.c.l.b16 %v490
      %v531 = vunpack.c.l.b16 %v491
      %v532 = vunpack.c.l.b16 %v492
      %v533 = vunpack.c.l.b16 %v493
      %v534 = vunpack.c.l.b16 %v494
      %v535 = vunpack.c.l.b16 %v495
      %v536 = vunpack.c.l.b16 %v496
      %v537 = vunpack.c.l.b16 %v497
      %v538 = vunpack.c.l.b16 %v498
      %v539 = vunpack.c.l.b16 %v499
      %v540 = vpack.c.b16 %v525, %v524
      %v541 = vpack.c.b16 %v527, %v526
      %v542 = vpack.c.b16 %v529, %v528
      %v543 = vpack.c.b16 %v531, %v530
      %v544 = vpack.c.b16 %v533, %v532
      %v545 = vpack.c.b16 %v535, %v534
      %v546 = vpack.c.b16 %v537, %v536
      %v547 = vpack.c.b16 %v539, %v538
      %556 = vmatpush.bf16.msra.mxu0 %v547
      %557 = vmatpush.bf16.msra.mxu0 %v546
      %558 = vmatpush.bf16.msra.mxu0 %v545
      %559 = vmatpush.bf16.msra.mxu0 %v544
      %560 = vmatpush.bf16.msra.mxu0 %v543
      %561 = vmatpush.bf16.msra.mxu0 %v542
      %562 = vmatpush.bf16.msra.mxu0 %v541
      %563 = vmatpush.bf16.msra.mxu0 %v540
      %564 = vmatmul.bf16.gmra.mxu0 %v504
      %v565 = vpop.f32.mrf.mxu0
      %v566 = vadd.f32 0.0, %v565
      %v567 = vpop.f32.mrf.mxu0
      %v568 = vadd.f32 0.0, %v567
      %569 = vmatmul.bf16.gmra.mxu0 %v505
      %v570 = vpop.f32.mrf.mxu0
      %v571 = vadd.f32 0.0, %v570
      %v572 = vpop.f32.mrf.mxu0
      %v573 = vadd.f32 0.0, %v572
      %574 = vdwg.mxu0
      %v575 = vadd.f32 %v443, %v566
      %v576 = vadd.f32 %v445, %v568
      %v577 = vadd.f32 %v448, %v571
      %v578 = vadd.f32 %v450, %v573
      %s579 = sadd.s32 %s194, 1
      %s580 = smul.u32 %s579, 2
      %s581 = smul.addr %s580, 4
      %s582 = scalar_lea.vmem %s183, %s581
      %v583 = vld [vmem:[%s582] sm:$0xf]
      %v584 = vld [vmem:[%s582 + $0x8] sm:$0xf]
      %v585 = vld [vmem:[%s582 + $0x10] sm:$0xf]
      %v586 = vld [vmem:[%s582 + $0x18] sm:$0xf]
      %s587 = scalar_lea.vmem %s1, 192
      %v588 = vld [vmem:[%s587] sm:$0xf]
      %v589 = vld [vmem:[%s587 + $0x4] sm:$0xf]
      %v590 = vld [vmem:[%s587 + $0x8] sm:$0xf]
      %v591 = vld [vmem:[%s587 + $0xc] sm:$0xf]
      %v592 = vld [vmem:[%s587 + $0x10] sm:$0xf]
      %v593 = vld [vmem:[%s587 + $0x14] sm:$0xf]
      %v594 = vld [vmem:[%s587 + $0x18] sm:$0xf]
      %v595 = vld [vmem:[%s587 + $0x1c] sm:$0xf]
      %v596 = vld [vmem:[%s587 + $0x20] sm:$0xf]
      %v597 = vld [vmem:[%s587 + $0x24] sm:$0xf]
      %v598 = vld [vmem:[%s587 + $0x28] sm:$0xf]
      %v599 = vld [vmem:[%s587 + $0x2c] sm:$0xf]
      %v600 = vld [vmem:[%s587 + $0x30] sm:$0xf]
      %v601 = vld [vmem:[%s587 + $0x34] sm:$0xf]
      %v602 = vld [vmem:[%s587 + $0x38] sm:$0xf]
      %v603 = vld [vmem:[%s587 + $0x3c] sm:$0xf]
      %v608 = vunpack.c.l.b16 %v583
      %v609 = vunpack.c.l.b16 %v584
      %v610 = vunpack.c.l.b16 %v585
      %v611 = vunpack.c.l.b16 %v586
      %v612 = vpack.c.b16 %v609, %v608
      %v613 = vpack.c.b16 %v611, %v610
      %v632 = vunpack.c.l.b16 %v588
      %v633 = vunpack.c.l.b16 %v589
      %v634 = vunpack.c.l.b16 %v590
      %v635 = vunpack.c.l.b16 %v591
      %v636 = vunpack.c.l.b16 %v592
      %v637 = vunpack.c.l.b16 %v593
      %v638 = vunpack.c.l.b16 %v594
      %v639 = vunpack.c.l.b16 %v595
      %v640 = vunpack.c.l.b16 %v596
      %v641 = vunpack.c.l.b16 %v597
      %v642 = vunpack.c.l.b16 %v598
      %v643 = vunpack.c.l.b16 %v599
      %v644 = vunpack.c.l.b16 %v600
      %v645 = vunpack.c.l.b16 %v601
      %v646 = vunpack.c.l.b16 %v602
      %v647 = vunpack.c.l.b16 %v603
      %v648 = vpack.c.b16 %v633, %v632
      %v649 = vpack.c.b16 %v635, %v634
      %v650 = vpack.c.b16 %v637, %v636
      %v651 = vpack.c.b16 %v639, %v638
      %v652 = vpack.c.b16 %v641, %v640
      %v653 = vpack.c.b16 %v643, %v642
      %v654 = vpack.c.b16 %v645, %v644
      %v655 = vpack.c.b16 %v647, %v646
      %664 = vmatpush.bf16.msra.mxu0 %v655
      %665 = vmatpush.bf16.msra.mxu0 %v654
      %666 = vmatpush.bf16.msra.mxu0 %v653
      %667 = vmatpush.bf16.msra.mxu0 %v652
      %668 = vmatpush.bf16.msra.mxu0 %v651
      %669 = vmatpush.bf16.msra.mxu0 %v650
      %670 = vmatpush.bf16.msra.mxu0 %v649
      %671 = vmatpush.bf16.msra.mxu0 %v648
      %672 = vmatmul.bf16.gmra.mxu0 %v612
      %v673 = vpop.f32.mrf.mxu0
      %v674 = vadd.f32 0.0, %v673
      %v675 = vpop.f32.mrf.mxu0
      %v676 = vadd.f32 0.0, %v675
      %677 = vmatmul.bf16.gmra.mxu0 %v613
      %v678 = vpop.f32.mrf.mxu0
      %v679 = vadd.f32 0.0, %v678
      %v680 = vpop.f32.mrf.mxu0
      %v681 = vadd.f32 0.0, %v680
      %682 = vdwg.mxu0
      %v683 = vadd.f32 %v575, %v674
      %v684 = vadd.f32 %v576, %v676
      %v685 = vadd.f32 %v577, %v679
      %v686 = vadd.f32 %v578, %v681
      %v687 = vld [vmem:[%s582] sm:$0xf]
      %v688 = vld [vmem:[%s582 + $0x4] sm:$0x1]
      %v689 = vld [vmem:[%s582 + $0x8] sm:$0xf]
      %v690 = vld [vmem:[%s582 + $0xc] sm:$0x1]
      %v691 = vld [vmem:[%s582 + $0x10] sm:$0xf]
      %v692 = vld [vmem:[%s582 + $0x14] sm:$0x1]
      %v693 = vld [vmem:[%s582 + $0x18] sm:$0xf]
      %v694 = vld [vmem:[%s582 + $0x1c] sm:$0x1]
      %v696 = vshrl.u32 %v687, 16
      %v698 = vrot.slane %v696, 4
      %v699 = vshll.u32 %v687, 16
      %v701 = vrot.slane %v699, 5
      %v702 = vor.u32 %v698, %v701
      %v703 = vrot.slane %v702, 4
      %v705 = vshll.u32 %v688, 16
      %v707 = vrot.slane %v705, 5
      %v708 = vsel %vm224, %v703, %v707
      %v710 = vshrl.u32 %v689, 16
      %v712 = vrot.slane %v710, 4
      %v713 = vshll.u32 %v689, 16
      %v715 = vrot.slane %v713, 5
      %v716 = vor.u32 %v712, %v715
      %v717 = vrot.slane %v716, 4
      %v719 = vshll.u32 %v690, 16
      %v721 = vrot.slane %v719, 5
      %v722 = vsel %vm224, %v717, %v721
      %v724 = vshrl.u32 %v691, 16
      %v726 = vrot.slane %v724, 4
      %v727 = vshll.u32 %v691, 16
      %v729 = vrot.slane %v727, 5
      %v730 = vor.u32 %v726, %v729
      %v731 = vrot.slane %v730, 4
      %v733 = vshll.u32 %v692, 16
      %v735 = vrot.slane %v733, 5
      %v736 = vsel %vm224, %v731, %v735
      %v738 = vshrl.u32 %v693, 16
      %v740 = vrot.slane %v738, 4
      %v741 = vshll.u32 %v693, 16
      %v743 = vrot.slane %v741, 5
      %v744 = vor.u32 %v740, %v743
      %v745 = vrot.slane %v744, 4
      %v747 = vshll.u32 %v694, 16
      %v749 = vrot.slane %v747, 5
      %v750 = vsel %vm224, %v745, %v749
      %s751 = scalar_lea.vmem %s1, 256
      %v752 = vld [vmem:[%s751] sm:$0xf]
      %v753 = vld [vmem:[%s751 + $0x4] sm:$0xf]
      %v754 = vld [vmem:[%s751 + $0x8] sm:$0xf]
      %v755 = vld [vmem:[%s751 + $0xc] sm:$0xf]
      %v756 = vld [vmem:[%s751 + $0x10] sm:$0xf]
      %v757 = vld [vmem:[%s751 + $0x14] sm:$0xf]
      %v758 = vld [vmem:[%s751 + $0x18] sm:$0xf]
      %v759 = vld [vmem:[%s751 + $0x1c] sm:$0xf]
      %v760 = vld [vmem:[%s751 + $0x20] sm:$0xf]
      %v761 = vld [vmem:[%s751 + $0x24] sm:$0xf]
      %v762 = vld [vmem:[%s751 + $0x28] sm:$0xf]
      %v763 = vld [vmem:[%s751 + $0x2c] sm:$0xf]
      %v764 = vld [vmem:[%s751 + $0x30] sm:$0xf]
      %v765 = vld [vmem:[%s751 + $0x34] sm:$0xf]
      %v766 = vld [vmem:[%s751 + $0x38] sm:$0xf]
      %v767 = vld [vmem:[%s751 + $0x3c] sm:$0xf]
      %v768 = vunpack.c.l.b16 %v708
      %v769 = vunpack.c.l.b16 %v722
      %v770 = vunpack.c.l.b16 %v736
      %v771 = vunpack.c.l.b16 %v750
      %v772 = vpack.c.b16 %v769, %v768
      %v773 = vpack.c.b16 %v771, %v770
      %v792 = vunpack.c.l.b16 %v752
      %v793 = vunpack.c.l.b16 %v753
      %v794 = vunpack.c.l.b16 %v754
      %v795 = vunpack.c.l.b16 %v755
      %v796 = vunpack.c.l.b16 %v756
      %v797 = vunpack.c.l.b16 %v757
      %v798 = vunpack.c.l.b16 %v758
      %v799 = vunpack.c.l.b16 %v759
      %v800 = vunpack.c.l.b16 %v760
      %v801 = vunpack.c.l.b16 %v761
      %v802 = vunpack.c.l.b16 %v762
      %v803 = vunpack.c.l.b16 %v763
      %v804 = vunpack.c.l.b16 %v764
      %v805 = vunpack.c.l.b16 %v765
      %v806 = vunpack.c.l.b16 %v766
      %v807 = vunpack.c.l.b16 %v767
      %v808 = vpack.c.b16 %v793, %v792
      %v809 = vpack.c.b16 %v795, %v794
      %v810 = vpack.c.b16 %v797, %v796
      %v811 = vpack.c.b16 %v799, %v798
      %v812 = vpack.c.b16 %v801, %v800
      %v813 = vpack.c.b16 %v803, %v802
      %v814 = vpack.c.b16 %v805, %v804
      %v815 = vpack.c.b16 %v807, %v806
      %824 = vmatpush.bf16.msra.mxu0 %v815
      %825 = vmatpush.bf16.msra.mxu0 %v814
      %826 = vmatpush.bf16.msra.mxu0 %v813
      %827 = vmatpush.bf16.msra.mxu0 %v812
      %828 = vmatpush.bf16.msra.mxu0 %v811
      %829 = vmatpush.bf16.msra.mxu0 %v810
      %830 = vmatpush.bf16.msra.mxu0 %v809
      %831 = vmatpush.bf16.msra.mxu0 %v808
      %832 = vmatmul.bf16.gmra.mxu0 %v772
      %v833 = vpop.f32.mrf.mxu0
      %v834 = vadd.f32 0.0, %v833
      %v835 = vpop.f32.mrf.mxu0
      %v836 = vadd.f32 0.0, %v835
      %837 = vmatmul.bf16.gmra.mxu0 %v773
      %v838 = vpop.f32.mrf.mxu0
      %v839 = vadd.f32 0.0, %v838
      %v840 = vpop.f32.mrf.mxu0
      %v841 = vadd.f32 0.0, %v840
      %842 = vdwg.mxu0
      %v843 = vadd.f32 %v683, %v834
      %v844 = vadd.f32 %v684, %v836
      %v845 = vadd.f32 %v685, %v839
      %v846 = vadd.f32 %v686, %v841
      %v847 = vld [vmem:[%s582] sm:$0xe]
      %v848 = vld [vmem:[%s582 + $0x8] sm:$0xe]
      %v849 = vld [vmem:[%s582 + $0x10] sm:$0xe]
      %v850 = vld [vmem:[%s582 + $0x18] sm:$0xe]
      %v859 = vrot.slane %v847, 5
      %v860 = vrot.slane %v859, 4
      %v861 = vrot.slane %v688, 5
      %v862 = vsel %vm466, %v860, %v861
      %v863 = vrot.slane %v848, 5
      %v864 = vrot.slane %v863, 4
      %v865 = vrot.slane %v690, 5
      %v866 = vsel %vm466, %v864, %v865
      %v867 = vrot.slane %v849, 5
      %v868 = vrot.slane %v867, 4
      %v869 = vrot.slane %v692, 5
      %v870 = vsel %vm466, %v868, %v869
      %v871 = vrot.slane %v850, 5
      %v872 = vrot.slane %v871, 4
      %v873 = vrot.slane %v694, 5
      %v874 = vsel %vm466, %v872, %v873
      %s875 = scalar_lea.vmem %s1, 320
      %v876 = vld [vmem:[%s875] sm:$0xf]
      %v877 = vld [vmem:[%s875 + $0x4] sm:$0xf]
      %v878 = vld [vmem:[%s875 + $0x8] sm:$0xf]
      %v879 = vld [vmem:[%s875 + $0xc] sm:$0xf]
      %v880 = vld [vmem:[%s875 + $0x10] sm:$0xf]
      %v881 = vld [vmem:[%s875 + $0x14] sm:$0xf]
      %v882 = vld [vmem:[%s875 + $0x18] sm:$0xf]
      %v883 = vld [vmem:[%s875 + $0x1c] sm:$0xf]
      %v884 = vld [vmem:[%s875 + $0x20] sm:$0xf]
      %v885 = vld [vmem:[%s875 + $0x24] sm:$0xf]
      %v886 = vld [vmem:[%s875 + $0x28] sm:$0xf]
      %v887 = vld [vmem:[%s875 + $0x2c] sm:$0xf]
      %v888 = vld [vmem:[%s875 + $0x30] sm:$0xf]
      %v889 = vld [vmem:[%s875 + $0x34] sm:$0xf]
      %v890 = vld [vmem:[%s875 + $0x38] sm:$0xf]
      %v891 = vld [vmem:[%s875 + $0x3c] sm:$0xf]
      %v892 = vunpack.c.l.b16 %v862
      %v893 = vunpack.c.l.b16 %v866
      %v894 = vunpack.c.l.b16 %v870
      %v895 = vunpack.c.l.b16 %v874
      %v896 = vpack.c.b16 %v893, %v892
      %v897 = vpack.c.b16 %v895, %v894
      %v916 = vunpack.c.l.b16 %v876
      %v917 = vunpack.c.l.b16 %v877
      %v918 = vunpack.c.l.b16 %v878
      %v919 = vunpack.c.l.b16 %v879
      %v920 = vunpack.c.l.b16 %v880
      %v921 = vunpack.c.l.b16 %v881
      %v922 = vunpack.c.l.b16 %v882
      %v923 = vunpack.c.l.b16 %v883
      %v924 = vunpack.c.l.b16 %v884
      %v925 = vunpack.c.l.b16 %v885
      %v926 = vunpack.c.l.b16 %v886
      %v927 = vunpack.c.l.b16 %v887
      %v928 = vunpack.c.l.b16 %v888
      %v929 = vunpack.c.l.b16 %v889
      %v930 = vunpack.c.l.b16 %v890
      %v931 = vunpack.c.l.b16 %v891
      %v932 = vpack.c.b16 %v917, %v916
      %v933 = vpack.c.b16 %v919, %v918
      %v934 = vpack.c.b16 %v921, %v920
      %v935 = vpack.c.b16 %v923, %v922
      %v936 = vpack.c.b16 %v925, %v924
      %v937 = vpack.c.b16 %v927, %v926
      %v938 = vpack.c.b16 %v929, %v928
      %v939 = vpack.c.b16 %v931, %v930
      %948 = vmatpush.bf16.msra.mxu0 %v939
      %949 = vmatpush.bf16.msra.mxu0 %v938
      %950 = vmatpush.bf16.msra.mxu0 %v937
      %951 = vmatpush.bf16.msra.mxu0 %v936
      %952 = vmatpush.bf16.msra.mxu0 %v935
      %953 = vmatpush.bf16.msra.mxu0 %v934
      %954 = vmatpush.bf16.msra.mxu0 %v933
      %955 = vmatpush.bf16.msra.mxu0 %v932
      %956 = vmatmul.bf16.gmra.mxu0 %v896
      %v957 = vpop.f32.mrf.mxu0
      %v958 = vadd.f32 0.0, %v957
      %v959 = vpop.f32.mrf.mxu0
      %v960 = vadd.f32 0.0, %v959
      %961 = vmatmul.bf16.gmra.mxu0 %v897
      %v962 = vpop.f32.mrf.mxu0
      %v963 = vadd.f32 0.0, %v962
      %v964 = vpop.f32.mrf.mxu0
      %v965 = vadd.f32 0.0, %v964
      %966 = vdwg.mxu0
      %v967 = vadd.f32 %v843, %v958
      %v968 = vadd.f32 %v844, %v960
      %v969 = vadd.f32 %v845, %v963
      %v970 = vadd.f32 %v846, %v965
      %s971 = sadd.s32 %s194, 2
      %s972 = smul.u32 %s971, 2
      %s973 = smul.addr %s972, 4
      %s974 = scalar_lea.vmem %s183, %s973
      %v975 = vld [vmem:[%s974] sm:$0xf]
      %v976 = vld [vmem:[%s974 + $0x8] sm:$0xf]
      %v977 = vld [vmem:[%s974 + $0x10] sm:$0xf]
      %v978 = vld [vmem:[%s974 + $0x18] sm:$0xf]
      %s979 = scalar_lea.vmem %s1, 384
      %v980 = vld [vmem:[%s979] sm:$0xf]
      %v981 = vld [vmem:[%s979 + $0x4] sm:$0xf]
      %v982 = vld [vmem:[%s979 + $0x8] sm:$0xf]
      %v983 = vld [vmem:[%s979 + $0xc] sm:$0xf]
      %v984 = vld [vmem:[%s979 + $0x10] sm:$0xf]
      %v985 = vld [vmem:[%s979 + $0x14] sm:$0xf]
      %v986 = vld [vmem:[%s979 + $0x18] sm:$0xf]
      %v987 = vld [vmem:[%s979 + $0x1c] sm:$0xf]
      %v988 = vld [vmem:[%s979 + $0x20] sm:$0xf]
      %v989 = vld [vmem:[%s979 + $0x24] sm:$0xf]
      %v990 = vld [vmem:[%s979 + $0x28] sm:$0xf]
      %v991 = vld [vmem:[%s979 + $0x2c] sm:$0xf]
      %v992 = vld [vmem:[%s979 + $0x30] sm:$0xf]
      %v993 = vld [vmem:[%s979 + $0x34] sm:$0xf]
      %v994 = vld [vmem:[%s979 + $0x38] sm:$0xf]
      %v995 = vld [vmem:[%s979 + $0x3c] sm:$0xf]
      %v1000 = vunpack.c.l.b16 %v975
      %v1001 = vunpack.c.l.b16 %v976
      %v1002 = vunpack.c.l.b16 %v977
      %v1003 = vunpack.c.l.b16 %v978
      %v1004 = vpack.c.b16 %v1001, %v1000
      %v1005 = vpack.c.b16 %v1003, %v1002
      %v1024 = vunpack.c.l.b16 %v980
      %v1025 = vunpack.c.l.b16 %v981
      %v1026 = vunpack.c.l.b16 %v982
      %v1027 = vunpack.c.l.b16 %v983
      %v1028 = vunpack.c.l.b16 %v984
      %v1029 = vunpack.c.l.b16 %v985
      %v1030 = vunpack.c.l.b16 %v986
      %v1031 = vunpack.c.l.b16 %v987
      %v1032 = vunpack.c.l.b16 %v988
      %v1033 = vunpack.c.l.b16 %v989
      %v1034 = vunpack.c.l.b16 %v990
      %v1035 = vunpack.c.l.b16 %v991
      %v1036 = vunpack.c.l.b16 %v992
      %v1037 = vunpack.c.l.b16 %v993
      %v1038 = vunpack.c.l.b16 %v994
      %v1039 = vunpack.c.l.b16 %v995
      %v1040 = vpack.c.b16 %v1025, %v1024
      %v1041 = vpack.c.b16 %v1027, %v1026
      %v1042 = vpack.c.b16 %v1029, %v1028
      %v1043 = vpack.c.b16 %v1031, %v1030
      %v1044 = vpack.c.b16 %v1033, %v1032
      %v1045 = vpack.c.b16 %v1035, %v1034
      %v1046 = vpack.c.b16 %v1037, %v1036
      %v1047 = vpack.c.b16 %v1039, %v1038
      %1056 = vmatpush.bf16.msra.mxu0 %v1047
      %1057 = vmatpush.bf16.msra.mxu0 %v1046
      %1058 = vmatpush.bf16.msra.mxu0 %v1045
      %1059 = vmatpush.bf16.msra.mxu0 %v1044
      %1060 = vmatpush.bf16.msra.mxu0 %v1043
      %1061 = vmatpush.bf16.msra.mxu0 %v1042
      %1062 = vmatpush.bf16.msra.mxu0 %v1041
      %1063 = vmatpush.bf16.msra.mxu0 %v1040
      %1064 = vmatmul.bf16.gmra.mxu0 %v1004
      %v1065 = vpop.f32.mrf.mxu0
      %v1066 = vadd.f32 0.0, %v1065
      %v1067 = vpop.f32.mrf.mxu0
      %v1068 = vadd.f32 0.0, %v1067
      %1069 = vmatmul.bf16.gmra.mxu0 %v1005
      %v1070 = vpop.f32.mrf.mxu0
      %v1071 = vadd.f32 0.0, %v1070
      %v1072 = vpop.f32.mrf.mxu0
      %v1073 = vadd.f32 0.0, %v1072
      %1074 = vdwg.mxu0
      %v1075 = vadd.f32 %v967, %v1066
      %v1076 = vadd.f32 %v968, %v1068
      %v1077 = vadd.f32 %v969, %v1071
      %v1078 = vadd.f32 %v970, %v1073
      %v1079 = vld [vmem:[%s974] sm:$0xf]
      %v1080 = vld [vmem:[%s974 + $0x4] sm:$0x1]
      %v1081 = vld [vmem:[%s974 + $0x8] sm:$0xf]
      %v1082 = vld [vmem:[%s974 + $0xc] sm:$0x1]
      %v1083 = vld [vmem:[%s974 + $0x10] sm:$0xf]
      %v1084 = vld [vmem:[%s974 + $0x14] sm:$0x1]
      %v1085 = vld [vmem:[%s974 + $0x18] sm:$0xf]
      %v1086 = vld [vmem:[%s974 + $0x1c] sm:$0x1]
      %v1088 = vshrl.u32 %v1079, 16
      %v1090 = vrot.slane %v1088, 4
      %v1091 = vshll.u32 %v1079, 16
      %v1093 = vrot.slane %v1091, 5
      %v1094 = vor.u32 %v1090, %v1093
      %v1095 = vrot.slane %v1094, 4
      %v1097 = vshll.u32 %v1080, 16
      %v1099 = vrot.slane %v1097, 5
      %v1100 = vsel %vm224, %v1095, %v1099
      %v1102 = vshrl.u32 %v1081, 16
      %v1104 = vrot.slane %v1102, 4
      %v1105 = vshll.u32 %v1081, 16
      %v1107 = vrot.slane %v1105, 5
      %v1108 = vor.u32 %v1104, %v1107
      %v1109 = vrot.slane %v1108, 4
      %v1111 = vshll.u32 %v1082, 16
      %v1113 = vrot.slane %v1111, 5
      %v1114 = vsel %vm224, %v1109, %v1113
      %v1116 = vshrl.u32 %v1083, 16
      %v1118 = vrot.slane %v1116, 4
      %v1119 = vshll.u32 %v1083, 16
      %v1121 = vrot.slane %v1119, 5
      %v1122 = vor.u32 %v1118, %v1121
      %v1123 = vrot.slane %v1122, 4
      %v1125 = vshll.u32 %v1084, 16
      %v1127 = vrot.slane %v1125, 5
      %v1128 = vsel %vm224, %v1123, %v1127
      %v1130 = vshrl.u32 %v1085, 16
      %v1132 = vrot.slane %v1130, 4
      %v1133 = vshll.u32 %v1085, 16
      %v1135 = vrot.slane %v1133, 5
      %v1136 = vor.u32 %v1132, %v1135
      %v1137 = vrot.slane %v1136, 4
      %v1139 = vshll.u32 %v1086, 16
      %v1141 = vrot.slane %v1139, 5
      %v1142 = vsel %vm224, %v1137, %v1141
      %s1143 = scalar_lea.vmem %s1, 448
      %v1144 = vld [vmem:[%s1143] sm:$0xf]
      %v1145 = vld [vmem:[%s1143 + $0x4] sm:$0xf]
      %v1146 = vld [vmem:[%s1143 + $0x8] sm:$0xf]
      %v1147 = vld [vmem:[%s1143 + $0xc] sm:$0xf]
      %v1148 = vld [vmem:[%s1143 + $0x10] sm:$0xf]
      %v1149 = vld [vmem:[%s1143 + $0x14] sm:$0xf]
      %v1150 = vld [vmem:[%s1143 + $0x18] sm:$0xf]
      %v1151 = vld [vmem:[%s1143 + $0x1c] sm:$0xf]
      %v1152 = vld [vmem:[%s1143 + $0x20] sm:$0xf]
      %v1153 = vld [vmem:[%s1143 + $0x24] sm:$0xf]
      %v1154 = vld [vmem:[%s1143 + $0x28] sm:$0xf]
      %v1155 = vld [vmem:[%s1143 + $0x2c] sm:$0xf]
      %v1156 = vld [vmem:[%s1143 + $0x30] sm:$0xf]
      %v1157 = vld [vmem:[%s1143 + $0x34] sm:$0xf]
      %v1158 = vld [vmem:[%s1143 + $0x38] sm:$0xf]
      %v1159 = vld [vmem:[%s1143 + $0x3c] sm:$0xf]
      %v1160 = vunpack.c.l.b16 %v1100
      %v1161 = vunpack.c.l.b16 %v1114
      %v1162 = vunpack.c.l.b16 %v1128
      %v1163 = vunpack.c.l.b16 %v1142
      %v1164 = vpack.c.b16 %v1161, %v1160
      %v1165 = vpack.c.b16 %v1163, %v1162
      %v1184 = vunpack.c.l.b16 %v1144
      %v1185 = vunpack.c.l.b16 %v1145
      %v1186 = vunpack.c.l.b16 %v1146
      %v1187 = vunpack.c.l.b16 %v1147
      %v1188 = vunpack.c.l.b16 %v1148
      %v1189 = vunpack.c.l.b16 %v1149
      %v1190 = vunpack.c.l.b16 %v1150
      %v1191 = vunpack.c.l.b16 %v1151
      %v1192 = vunpack.c.l.b16 %v1152
      %v1193 = vunpack.c.l.b16 %v1153
      %v1194 = vunpack.c.l.b16 %v1154
      %v1195 = vunpack.c.l.b16 %v1155
      %v1196 = vunpack.c.l.b16 %v1156
      %v1197 = vunpack.c.l.b16 %v1157
      %v1198 = vunpack.c.l.b16 %v1158
      %v1199 = vunpack.c.l.b16 %v1159
      %v1200 = vpack.c.b16 %v1185, %v1184
      %v1201 = vpack.c.b16 %v1187, %v1186
      %v1202 = vpack.c.b16 %v1189, %v1188
      %v1203 = vpack.c.b16 %v1191, %v1190
      %v1204 = vpack.c.b16 %v1193, %v1192
      %v1205 = vpack.c.b16 %v1195, %v1194
      %v1206 = vpack.c.b16 %v1197, %v1196
      %v1207 = vpack.c.b16 %v1199, %v1198
      %1216 = vmatpush.bf16.msra.mxu0 %v1207
      %1217 = vmatpush.bf16.msra.mxu0 %v1206
      %1218 = vmatpush.bf16.msra.mxu0 %v1205
      %1219 = vmatpush.bf16.msra.mxu0 %v1204
      %1220 = vmatpush.bf16.msra.mxu0 %v1203
      %1221 = vmatpush.bf16.msra.mxu0 %v1202
      %1222 = vmatpush.bf16.msra.mxu0 %v1201
      %1223 = vmatpush.bf16.msra.mxu0 %v1200
      %1224 = vmatmul.bf16.gmra.mxu0 %v1164
      %v1225 = vpop.f32.mrf.mxu0
      %v1226 = vadd.f32 0.0, %v1225
      %v1227 = vpop.f32.mrf.mxu0
      %v1228 = vadd.f32 0.0, %v1227
      %1229 = vmatmul.bf16.gmra.mxu0 %v1165
      %v1230 = vpop.f32.mrf.mxu0
      %v1231 = vadd.f32 0.0, %v1230
      %v1232 = vpop.f32.mrf.mxu0
      %v1233 = vadd.f32 0.0, %v1232
      %1234 = vdwg.mxu0
      %v1235 = vadd.f32 %v1075, %v1226
      %v1236 = vadd.f32 %v1076, %v1228
      %v1237 = vadd.f32 %v1077, %v1231
      %v1238 = vadd.f32 %v1078, %v1233
      %v1239 = vld [vmem:[%s974] sm:$0xe]
      %v1240 = vld [vmem:[%s974 + $0x8] sm:$0xe]
      %v1241 = vld [vmem:[%s974 + $0x10] sm:$0xe]
      %v1242 = vld [vmem:[%s974 + $0x18] sm:$0xe]
      %v1251 = vrot.slane %v1239, 5
      %v1252 = vrot.slane %v1251, 4
      %v1253 = vrot.slane %v1080, 5
      %v1254 = vsel %vm466, %v1252, %v1253
      %v1255 = vrot.slane %v1240, 5
      %v1256 = vrot.slane %v1255, 4
      %v1257 = vrot.slane %v1082, 5
      %v1258 = vsel %vm466, %v1256, %v1257
      %v1259 = vrot.slane %v1241, 5
      %v1260 = vrot.slane %v1259, 4
      %v1261 = vrot.slane %v1084, 5
      %v1262 = vsel %vm466, %v1260, %v1261
      %v1263 = vrot.slane %v1242, 5
      %v1264 = vrot.slane %v1263, 4
      %v1265 = vrot.slane %v1086, 5
      %v1266 = vsel %vm466, %v1264, %v1265
      %s1267 = scalar_lea.vmem %s1, 512
      %v1268 = vld [vmem:[%s1267] sm:$0xf]
      %v1269 = vld [vmem:[%s1267 + $0x4] sm:$0xf]
      %v1270 = vld [vmem:[%s1267 + $0x8] sm:$0xf]
      %v1271 = vld [vmem:[%s1267 + $0xc] sm:$0xf]
      %v1272 = vld [vmem:[%s1267 + $0x10] sm:$0xf]
      %v1273 = vld [vmem:[%s1267 + $0x14] sm:$0xf]
      %v1274 = vld [vmem:[%s1267 + $0x18] sm:$0xf]
      %v1275 = vld [vmem:[%s1267 + $0x1c] sm:$0xf]
      %v1276 = vld [vmem:[%s1267 + $0x20] sm:$0xf]
      %v1277 = vld [vmem:[%s1267 + $0x24] sm:$0xf]
      %v1278 = vld [vmem:[%s1267 + $0x28] sm:$0xf]
      %v1279 = vld [vmem:[%s1267 + $0x2c] sm:$0xf]
      %v1280 = vld [vmem:[%s1267 + $0x30] sm:$0xf]
      %v1281 = vld [vmem:[%s1267 + $0x34] sm:$0xf]
      %v1282 = vld [vmem:[%s1267 + $0x38] sm:$0xf]
      %v1283 = vld [vmem:[%s1267 + $0x3c] sm:$0xf]
      %v1284 = vunpack.c.l.b16 %v1254
      %v1285 = vunpack.c.l.b16 %v1258
      %v1286 = vunpack.c.l.b16 %v1262
      %v1287 = vunpack.c.l.b16 %v1266
      %v1288 = vpack.c.b16 %v1285, %v1284
      %v1289 = vpack.c.b16 %v1287, %v1286
      %v1308 = vunpack.c.l.b16 %v1268
      %v1309 = vunpack.c.l.b16 %v1269
      %v1310 = vunpack.c.l.b16 %v1270
      %v1311 = vunpack.c.l.b16 %v1271
      %v1312 = vunpack.c.l.b16 %v1272
      %v1313 = vunpack.c.l.b16 %v1273
      %v1314 = vunpack.c.l.b16 %v1274
      %v1315 = vunpack.c.l.b16 %v1275
      %v1316 = vunpack.c.l.b16 %v1276
      %v1317 = vunpack.c.l.b16 %v1277
      %v1318 = vunpack.c.l.b16 %v1278
      %v1319 = vunpack.c.l.b16 %v1279
      %v1320 = vunpack.c.l.b16 %v1280
      %v1321 = vunpack.c.l.b16 %v1281
      %v1322 = vunpack.c.l.b16 %v1282
      %v1323 = vunpack.c.l.b16 %v1283
      %v1324 = vpack.c.b16 %v1309, %v1308
      %v1325 = vpack.c.b16 %v1311, %v1310
      %v1326 = vpack.c.b16 %v1313, %v1312
      %v1327 = vpack.c.b16 %v1315, %v1314
      %v1328 = vpack.c.b16 %v1317, %v1316
      %v1329 = vpack.c.b16 %v1319, %v1318
      %v1330 = vpack.c.b16 %v1321, %v1320
      %v1331 = vpack.c.b16 %v1323, %v1322
      %1340 = vmatpush.bf16.msra.mxu0 %v1331
      %1341 = vmatpush.bf16.msra.mxu0 %v1330
      %1342 = vmatpush.bf16.msra.mxu0 %v1329
      %1343 = vmatpush.bf16.msra.mxu0 %v1328
      %1344 = vmatpush.bf16.msra.mxu0 %v1327
      %1345 = vmatpush.bf16.msra.mxu0 %v1326
      %1346 = vmatpush.bf16.msra.mxu0 %v1325
      %1347 = vmatpush.bf16.msra.mxu0 %v1324
      %1348 = vmatmul.bf16.gmra.mxu0 %v1288
      %v1349 = vpop.f32.mrf.mxu0
      %v1350 = vadd.f32 0.0, %v1349
      %v1351 = vpop.f32.mrf.mxu0
      %v1352 = vadd.f32 0.0, %v1351
      %1353 = vmatmul.bf16.gmra.mxu0 %v1289
      %v1354 = vpop.f32.mrf.mxu0
      %v1355 = vadd.f32 0.0, %v1354
      %v1356 = vpop.f32.mrf.mxu0
      %v1357 = vadd.f32 0.0, %v1356
      %1358 = vdwg.mxu0
      %v1359 = vadd.f32 %v1235, %v1350
      %v1360 = vadd.f32 %v1236, %v1352
      %v1361 = vadd.f32 %v1237, %v1355
      %v1362 = vadd.f32 %v1238, %v1357
      %v1363 = vld [vmem:[%s2] sm:$0x1]
      %v1365 = vperm.slane %v1363, 0
      %v1367 = vadd.f32 %v1359, %v1365
      %v1368 = vadd.f32 %v1360, %v1365
      %v1369 = vadd.f32 %v1361, %v1365
      %v1370 = vadd.f32 %v1362, %v1365
      %v1371 = vmax.f32 %v1367, 0.0
      %v1372 = vmax.f32 %v1368, 0.0
      %v1373 = vmax.f32 %v1369, 0.0
      %v1374 = vmax.f32 %v1370, 0.0
      %1375 = vst [vmem:[%s192] sm:$0xff] %v1371
      %1376 = vst [vmem:[%s192 + $0x8] sm:$0xff] %v1372
      %1377 = vst [vmem:[%s192 + $0x10] sm:$0xff] %v1373
      %1378 = vst [vmem:[%s192 + $0x18] sm:$0xff] %v1374
      %s1379 = smul.u32 4, %s19
      %p1380 = scmp.lt.s32.totalorder %s18, 1
      %s1381 = scalar_select %p1380, %s18, 1
      %p1382 = scmp.lt.s32.totalorder %s1379, 7
      %s1383 = scalar_select %p1382, %s1379, 7
      %s1384 = smul.addr %s1381, 8
      %s1385 = sadd.s32 %s1383, %s1384
      %s1386 = smul.addr %s1385, 8
      %s1387 = scalar_lea.vmem %s3, %s1386
      // Predicated region
      $region33: #{conv_block_forward.3} parent=31 // pred_check
        %p1388 = pneg %p114
      $region34: #{conv_block_forward.3} parent=31 // pred_check_branch
        %1390 = sbr.rel (%p1388) target = $region36
      $region35: #{conv_block_forward.3} parent=31 // pred_region
        %s1391 = smul.u32 4, %s19
      $region36: #{conv_block_forward.3} parent=31 // pred_fallthru
        _
    $region32: #{conv_block_forward.3} parent=5 // pred_fallthru
      _
    %p1392 = scmp.le.s32.totalorder 2, %s9
    // Predicated region
    $region37: #{conv_block_forward.3} parent=5 // pred_check
      %p1393 = pneg %p1392
    $region38: #{conv_block_forward.3} parent=5 // pred_check_branch
      %1395 = sbr.rel (%p1393) target = $region40
    $region39: #{conv_block_forward.3} parent=5 // pred_region
      %s1396 = ssub.s32 %s9, 2
      // Predicated region
      $region41: #{conv_block_forward.3} parent=39 // pred_check
        %p1397 = pneg %p120
      $region42: #{conv_block_forward.3} parent=39 // pred_check_branch
        %1399 = sbr.rel (%p1397) target = $region44
      $region43: #{conv_block_forward.3} parent=39 // pred_region
        %s1400 = smul.u32 4, %s21
        %p1401 = scmp.lt.s32.totalorder %s20, 1
        %s1402 = scalar_select %p1401, %s20, 1
        %p1403 = scmp.lt.s32.totalorder %s1400, 7
        %s1404 = scalar_select %p1403, %s1400, 7
        %s1405 = smul.addr %s1402, 8
        %s1406 = sadd.s32 %s1404, %s1405
        %s1407 = smul.addr %s1406, 8
        %s1408 = scalar_lea.vmem %s3, %s1407
      $region44: #{conv_block_forward.3} parent=39 // pred_fallthru
        _
    $region40: #{conv_block_forward.3} parent=5 // pred_fallthru
      _
  $region6: #{conv_block_forward.3} parent=0 // loop_footer
    %s13 = sadd.s32 1, %s9
  $region7: #{conv_block_forward.3} parent=0 // loop_footer_branch
    %8 = sbr.rel target = $region3
  $region8: #{conv_block_forward.3} parent=0 // loop_exit
    _

// kernel: conv_block_forward.2
$region0: #{conv_block_forward.2}
  #allocation0 [shape = 'u32[]', space=smem, size = 0x4, offset = 0x4, fixed_abs, tag = 'smem constant byte address 0x4 - core index']
  #allocation1 [shape = 'u32[72,128]{1,0:T(1,128)}', space=vmem, size = 0x9000, scoped, tag = 'internal scratch']
  %s0 = inlined_call_operand.vmem [shape: bf16[2,4,9,16,128], index: 0, kind: input, shape index: {}]
  %s1 = inlined_call_operand.vmem [shape: bf16[9,128,128], index: 1, kind: input, shape index: {}]
  %s2 = inlined_call_operand.vmem [shape: f32[1,128], index: 2, kind: input, shape index: {}]
  %s3 = inlined_call_operand.vmem [shape: bf16[2,64,128], index: 3, kind: output, shape index: {}]
  %s4 = sld [smem:[#allocation0]]
  $region45: #{conv_block_forward.2} parent=0
    _
  %s6 = ssub.s32 1, %s4
  %s7 = scalar_select 0, %s6, %s4
  loop: start=0, step=1, limit=6
  $region2: #{conv_block_forward.2} parent=0 // loop_pre_header
    _
  $region3: #{conv_block_forward.2} parent=0 // loop_header
    %s9 = sphi 0, %s13
    %p10 = scmp.ge.s32.totalorder %s9, 6
    %s16 = sphi 0, %s28
    %s17 = sphi 0, %s24
    %s18 = sphi 0, %s16
    %s19 = sphi 0, %s17
    %s20 = sphi 0, %s18
    %s21 = sphi 0, %s19
    %s31 = sphi 0, %s33
    %s34 = sphi 0, %s31
    %s35 = sphi 0, %s34
    %s51 = sphi 0, %s35
    %s55 = sphi 0, %s55
    %s57 = sphi 0, %s55
    %s58 = sphi 0, %s57
    %s72 = sphi 0, %s58
    %s76 = sphi 0, %s76
    %s78 = sphi 0, %s76
    %s79 = sphi 0, %s78
    %s93 = sphi 0, %s79
    %s101 = sphi 0, %s103
    %s104 = sphi 0, %s101
    %s105 = sphi 0, %s104
    %s121 = sphi 0, %s105
  $region4: #{conv_block_forward.2} parent=0 // loop_header_branch
    %12 = sbr.rel (%p10) target = $region8
  $region5: #{conv_block_forward.2} parent=0 // loop_body
    %s14 = ssub.s32 %s9, 1
    %s15 = ssub.s32 %s9, 2
    %s22 = sadd.s32 1, %s17
    %p23 = scmp.ge.s32.totalorder %s22, 2
    %s24 = scalar_select %p23, 0, %s22
    %s25 = sadd.s32 1, %s16
    %s26 = scalar_select %p23, %s25, %s16
    %p27 = scmp.ge.s32.totalorder %s26, 2
    %s28 = scalar_select %p27, 0, %s26
    %s29 = ssub.s32 %s16, %s28
    %p30 = scmp.eq.s32.totalorder %s29, 0
    %s32 = sadd.s32 %s31, 1
    %s33 = scalar_select %p30, %s31, %s32
    %p36 = pneg %p30
    %p37 = scmp.eq.s32.totalorder %s9, 3
    %p38 = por %p36, %p37
    %p39 = scmp.ne.s32.totalorder %s31, %s34
    %p40 = scmp.eq.s32.totalorder %s9, 0
    %p41 = por %p39, %p40
    %p42 = scmp.ne.s32.totalorder %s31, %s34
    %p43 = scmp.eq.s32.totalorder %s14, 3
    %p44 = por %p42, %p43
    %p45 = scmp.ne.s32.totalorder %s34, %s35
    %p46 = scmp.eq.s32.totalorder %s14, 0
    %p47 = por %p45, %p46
    %p48 = scmp.ne.s32.totalorder %s34, %s35
    %p49 = scmp.eq.s32.totalorder %s15, 3
    %p50 = por %p48, %p49
    %p52 = scmp.ne.s32.totalorder %s35, %s51
    %p53 = scmp.eq.s32.totalorder %s15, 0
    %p54 = por %p52, %p53
    %s56 = sadd.s32 %s55, 1
    %p59 = scmp.eq.s32.totalorder %s9, 3
    %p60 = scmp.ne.s32.totalorder %s55, %s57
    %p61 = scmp.eq.s32.totalorder %s9, 0
    %p62 = por %p60, %p61
    %p63 = scmp.ne.s32.totalorder %s55, %s57
    %p64 = scmp.eq.s32.totalorder %s14, 3
    %p65 = por %p63, %p64
    %p66 = scmp.ne.s32.totalorder %s57, %s58
    %p67 = scmp.eq.s32.totalorder %s14, 0
    %p68 = por %p66, %p67
    %p69 = scmp.ne.s32.totalorder %s57, %s58
    %p70 = scmp.eq.s32.totalorder %s15, 3
    %p71 = por %p69, %p70
    %p73 = scmp.ne.s32.totalorder %s58, %s72
    %p74 = scmp.eq.s32.totalorder %s15, 0
    %p75 = por %p73, %p74
    %s77 = sadd.s32 %s76, 1
    %p80 = scmp.eq.s32.totalorder %s9, 3
    %p81 = scmp.ne.s32.totalorder %s76, %s78
    %p82 = scmp.eq.s32.totalorder %s9, 0
    %p83 = por %p81, %p82
    %p84 = scmp.ne.s32.totalorder %s76, %s78
    %p85 = scmp.eq.s32.totalorder %s14, 3
    %p86 = por %p84, %p85
    %p87 = scmp.ne.s32.totalorder %s78, %s79
    %p88 = scmp.eq.s32.totalorder %s14, 0
    %p89 = por %p87, %p88
    %p90 = scmp.ne.s32.totalorder %s78, %s79
    %p91 = scmp.eq.s32.totalorder %s15, 3
    %p92 = por %p90, %p91
    %p94 = scmp.ne.s32.totalorder %s79, %s93
    %p95 = scmp.eq.s32.totalorder %s15, 0
    %p96 = por %p94, %p95
    %s97 = ssub.s32 %s16, %s28
    %s98 = ssub.s32 %s17, %s24
    %s99 = sor.u32 %s97, %s98
    %p100 = scmp.eq.s32.totalorder %s99, 0
    %s102 = sadd.s32 %s101, 1
    %s103 = scalar_select %p100, %s101, %s102
    %p106 = pneg %p100
    %p107 = scmp.eq.s32.totalorder %s9, 3
    %p108 = por %p106, %p107
    %p109 = scmp.ne.s32.totalorder %s101, %s104
    %p110 = scmp.eq.s32.totalorder %s9, 0
    %p111 = por %p109, %p110
    %p112 = scmp.ne.s32.totalorder %s101, %s104
    %p113 = scmp.eq.s32.totalorder %s14, 3
    %p114 = por %p112, %p113
    %p115 = scmp.ne.s32.totalorder %s104, %s105
    %p116 = scmp.eq.s32.totalorder %s14, 0
    %p117 = por %p115, %p116
    %p118 = scmp.ne.s32.totalorder %s104, %s105
    %p119 = scmp.eq.s32.totalorder %s15, 3
    %p120 = por %p118, %p119
    %p122 = scmp.ne.s32.totalorder %s105, %s121
    %p123 = scmp.eq.s32.totalorder %s15, 0
    %p124 = por %p122, %p123
    %p125 = scmp.le.s32.totalorder 1, %s9
    %p126 = scmp.lt.s32.totalorder %s9, 5
    %p127 = pnand %p125, %p126
    %p128 = pneg %p127
    // Predicated region
    $region9: #{conv_block_forward.2} parent=5 // pred_check
      _
    $region10: #{conv_block_forward.2} parent=5 // pred_check_branch
      %130 = sbr.rel (%p127) target = $region12
    $region11: #{conv_block_forward.2} parent=5 // pred_region
      %s131 = ssub.s32 %s9, 1
      // Predicated region
      $region13: #{conv_block_forward.2} parent=11 // pred_check
        %p132 = pneg %p68
      $region14: #{conv_block_forward.2} parent=11 // pred_check_branch
        %134 = sbr.rel (%p132) target = $region16
      $region15: #{conv_block_forward.2} parent=11 // pred_region
        _
      $region16: #{conv_block_forward.2} parent=11 // pred_fallthru
        _
      // Predicated region
      $region17: #{conv_block_forward.2} parent=11 // pred_check
        %p135 = pneg %p89
      $region18: #{conv_block_forward.2} parent=11 // pred_check_branch
        %137 = sbr.rel (%p135) target = $region20
      $region19: #{conv_block_forward.2} parent=11 // pred_region
        _
      $region20: #{conv_block_forward.2} parent=11 // pred_fallthru
        _
    $region12: #{conv_block_forward.2} parent=5 // pred_fallthru
      _
    %p138 = scmp.lt.s32.totalorder %s9, 4
    // Predicated region
    $region21: #{conv_block_forward.2} parent=5 // pred_check
      %p139 = pneg %p138
    $region22: #{conv_block_forward.2} parent=5 // pred_check_branch
      %141 = sbr.rel (%p139) target = $region24
    $region23: #{conv_block_forward.2} parent=5 // pred_region
      // Predicated region
      $region25: #{conv_block_forward.2} parent=23 // pred_check
        %p142 = pneg %p41
      $region26: #{conv_block_forward.2} parent=23 // pred_check_branch
        %144 = sbr.rel (%p142) target = $region28
      $region27: #{conv_block_forward.2} parent=23 // pred_region
        %p145 = scmp.lt.s32.totalorder %s16, 1
        %s146 = scalar_select %p145, %s16, 1
        %s147 = smul.addr %s146, 72
        %s148 = smul.addr %s147, 4
        %s149 = scalar_lea.vmem %s0, %s148
      $region28: #{conv_block_forward.2} parent=23 // pred_fallthru
        _
    $region24: #{conv_block_forward.2} parent=5 // pred_fallthru
      _
    %p150 = scmp.le.s32.totalorder 1, %s9
    %p151 = scmp.lt.s32.totalorder %s9, 5
    %p152 = pnand %p150, %p151
    %p153 = pneg %p152
    // Predicated region
    $region29: #{conv_block_forward.2} parent=5 // pred_check
      _
    $region30: #{conv_block_forward.2} parent=5 // pred_check_branch
      %155 = sbr.rel (%p152) target = $region32
    $region31: #{conv_block_forward.2} parent=5 // pred_region
      %s156 = ssub.s32 %s9, 1
      %p157 = scmp.lt.s32.totalorder %s18, 1
      %s158 = scalar_select %p157, %s18, 1
      %s159 = smul.addr %s158, 72
      %s160 = smul.addr %s159, 4
      %s161 = scalar_lea.vmem %s0, %s160
      %p162 = pneg %p47
      %p163 = pneg %p44
      %p164 = pneg %p68
      %p165 = pneg %p65
      %p166 = pneg %p89
      %p167 = pneg %p86
      %p168 = pneg %p117
      %p169 = pneg %p114
      %s170 = smul.u32 4, %s19
      %p171 = scmp.lt.s32.totalorder %s18, 1
      %s172 = scalar_select %p171, %s18, 1
      %p173 = scmp.lt.s32.totalorder %s170, 7
      %s174 = scalar_select %p173, %s170, 7
      %s175 = smul.addr %s172, 8
      %s176 = sadd.s32 %s174, %s175
      %s177 = smul.addr %s176, 4
      %s178 = scalar_lea.vmem %s3, %s177
      %p179 = scmp.lt.s32.totalorder %s18, 1
      %s180 = scalar_select %p179, %s18, 1
      %s181 = smul.addr %s180, 72
      %s182 = smul.addr %s181, 4
      %s183 = scalar_lea.vmem %s0, %s182
      %s184 = smul.u32 4, %s19
      %p185 = scmp.lt.s32.totalorder %s18, 1
      %s186 = scalar_select %p185, %s18, 1
      %p187 = scmp.lt.s32.totalorder %s184, 7
      %s188 = scalar_select %p187, %s184, 7
      %s189 = smul.addr %s186, 8
      %s190 = sadd.s32 %s188, %s189
      %s191 = smul.addr %s190, 4
      %s192 = scalar_lea.vmem %s3, %s191
      %s193 = smul.u32 4, %s19
      %s194 = smul.u32 %s19, 4
      %s195 = smul.u32 %s194, 2
      %s196 = smul.addr %s195, 4
      %s197 = scalar_lea.vmem %s183, %s196
      %v198 = vld [vmem:[%s197] sm:$0xf]
      %v199 = vld [vmem:[%s197 + $0x8] sm:$0xf]
      %v200 = vld [vmem:[%s197 + $0x10] sm:$0xf]
      %v201 = vld [vmem:[%s197 + $0x18] sm:$0xf]
      %v202 = vld [vmem:[%s1] sm:$0xf]
      %v203 = vld [vmem:[%s1 + $0x4] sm:$0xf]
      %v204 = vld [vmem:[%s1 + $0x8] sm:$0xf]
      %v205 = vld [vmem:[%s1 + $0xc] sm:$0xf]
      %v206 = vld [vmem:[%s1 + $0x10] sm:$0xf]
      %v207 = vld [vmem:[%s1 + $0x14] sm:$0xf]
      %v208 = vld [vmem:[%s1 + $0x18] sm:$0xf]
      %v209 = vld [vmem:[%s1 + $0x1c] sm:$0xf]
      %v210 = vld [vmem:[%s1 + $0x20] sm:$0xf]
      %v211 = vld [vmem:[%s1 + $0x24] sm:$0xf]
      %v212 = vld [vmem:[%s1 + $0x28] sm:$0xf]
      %v213 = vld [vmem:[%s1 + $0x2c] sm:$0xf]
      %v214 = vld [vmem:[%s1 + $0x30] sm:$0xf]
      %v215 = vld [vmem:[%s1 + $0x34] sm:$0xf]
      %v216 = vld [vmem:[%s1 + $0x38] sm:$0xf]
      %v217 = vld [vmem:[%s1 + $0x3c] sm:$0xf]
      %s218 = sadd.s32 %s195, 18
      %s219 = smul.addr %s218, 4
      %s220 = scalar_lea.vmem %s183, %s219
      %v221 = vld [vmem:[%s220] sm:$0xf]
      %v222 = vld [vmem:[%s220 + $0x8] sm:$0xf]
      %v223 = vld [vmem:[%s220 + $0x10] sm:$0xf]
      %v224 = vld [vmem:[%s220 + $0x18] sm:$0xf]
      %s225 = scalar_lea.vmem %s1, 64
      %v226 = vld [vmem:[%s225] sm:$0xf]
      %v227 = vld [vmem:[%s225 + $0x4] sm:$0xf]
      %v228 = vld [vmem:[%s225 + $0x8] sm:$0xf]
      %v229 = vld [vmem:[%s225 + $0xc] sm:$0xf]
      %v230 = vld [vmem:[%s225 + $0x10] sm:$0xf]
      %v231 = vld [vmem:[%s225 + $0x14] sm:$0xf]
      %v232 = vld [vmem:[%s225 + $0x18] sm:$0xf]
      %v233 = vld [vmem:[%s225 + $0x1c] sm:$0xf]
      %v234 = vld [vmem:[%s225 + $0x20] sm:$0xf]
      %v235 = vld [vmem:[%s225 + $0x24] sm:$0xf]
      %v236 = vld [vmem:[%s225 + $0x28] sm:$0xf]
      %v237 = vld [vmem:[%s225 + $0x2c] sm:$0xf]
      %v238 = vld [vmem:[%s225 + $0x30] sm:$0xf]
      %v239 = vld [vmem:[%s225 + $0x34] sm:$0xf]
      %v240 = vld [vmem:[%s225 + $0x38] sm:$0xf]
      %v241 = vld [vmem:[%s225 + $0x3c] sm:$0xf]
      %v246 = vunpack.c.l.b16 %v221
      %v247 = vunpack.c.l.b16 %v222
      %v248 = vunpack.c.l.b16 %v223
      %v249 = vunpack.c.l.b16 %v224
      %v250 = vpack.c.b16 %v247, %v246
      %v251 = vpack.c.b16 %v249, %v248
      %v270 = vunpack.c.l.b16 %v226
      %v271 = vunpack.c.l.b16 %v227
      %v272 = vunpack.c.l.b16 %v228
      %v273 = vunpack.c.l.b16 %v229
      %v274 = vunpack.c.l.b16 %v230
      %v275 = vunpack.c.l.b16 %v231
      %v276 = vunpack.c.l.b16 %v232
      %v277 = vunpack.c.l.b16 %v233
      %v278 = vunpack.c.l.b16 %v234
      %v279 = vunpack.c.l.b16 %v235
      %v280 = vunpack.c.l.b16 %v236
      %v281 = vunpack.c.l.b16 %v237
      %v282 = vunpack.c.l.b16 %v238
      %v283 = vunpack.c.l.b16 %v239
      %v284 = vunpack.c.l.b16 %v240
      %v285 = vunpack.c.l.b16 %v241
      %v286 = vpack.c.b16 %v271, %v270
      %v287 = vpack.c.b16 %v273, %v272
      %v288 = vpack.c.b16 %v275, %v274
      %v289 = vpack.c.b16 %v277, %v276
      %v290 = vpack.c.b16 %v279, %v278
      %v291 = vpack.c.b16 %v281, %v280
      %v292 = vpack.c.b16 %v283, %v282
      %v293 = vpack.c.b16 %v285, %v284
      %302 = vmatpush.bf16.msra.mxu0 %v293
      %303 = vmatpush.bf16.msra.mxu0 %v292
      %304 = vmatpush.bf16.msra.mxu0 %v291
      %305 = vmatpush.bf16.msra.mxu0 %v290
      %306 = vmatpush.bf16.msra.mxu0 %v289
      %307 = vmatpush.bf16.msra.mxu0 %v288
      %308 = vmatpush.bf16.msra.mxu0 %v287
      %309 = vmatpush.bf16.msra.mxu0 %v286
      %310 = vmatmul.bf16.gmra.mxu0 %v250
      %v311 = vpop.f32.mrf.mxu0
      %v312 = vadd.f32 0.0, %v311
      %v313 = vpop.f32.mrf.mxu0
      %v314 = vadd.f32 0.0, %v313
      %315 = vmatmul.bf16.gmra.mxu0 %v251
      %v316 = vpop.f32.mrf.mxu0
      %v317 = vadd.f32 0.0, %v316
      %v318 = vpop.f32.mrf.mxu0
      %v319 = vadd.f32 0.0, %v318
      %320 = vdwg.mxu0
      %v325 = vunpack.c.l.b16 %v198
      %v326 = vunpack.c.l.b16 %v199
      %v327 = vunpack.c.l.b16 %v200
      %v328 = vunpack.c.l.b16 %v201
      %v329 = vpack.c.b16 %v326, %v325
      %v330 = vpack.c.b16 %v328, %v327
      %v349 = vunpack.c.l.b16 %v202
      %v350 = vunpack.c.l.b16 %v203
      %v351 = vunpack.c.l.b16 %v204
      %v352 = vunpack.c.l.b16 %v205
      %v353 = vunpack.c.l.b16 %v206
      %v354 = vunpack.c.l.b16 %v207
      %v355 = vunpack.c.l.b16 %v208
      %v356 = vunpack.c.l.b16 %v209
      %v357 = vunpack.c.l.b16 %v210
      %v358 = vunpack.c.l.b16 %v211
      %v359 = vunpack.c.l.b16 %v212
      %v360 = vunpack.c.l.b16 %v213
      %v361 = vunpack.c.l.b16 %v214
      %v362 = vunpack.c.l.b16 %v215
      %v363 = vunpack.c.l.b16 %v216
      %v364 = vunpack.c.l.b16 %v217
      %v365 = vpack.c.b16 %v350, %v349
      %v366 = vpack.c.b16 %v352, %v351
      %v367 = vpack.c.b16 %v354, %v353
      %v368 = vpack.c.b16 %v356, %v355
      %v369 = vpack.c.b16 %v358, %v357
      %v370 = vpack.c.b16 %v360, %v359
      %v371 = vpack.c.b16 %v362, %v361
      %v372 = vpack.c.b16 %v364, %v363
      %381 = vmatpush.bf16.msra.mxu0 %v372
      %382 = vmatpush.bf16.msra.mxu0 %v371
      %383 = vmatpush.bf16.msra.mxu0 %v370
      %384 = vmatpush.bf16.msra.mxu0 %v369
      %385 = vmatpush.bf16.msra.mxu0 %v368
      %386 = vmatpush.bf16.msra.mxu0 %v367
      %387 = vmatpush.bf16.msra.mxu0 %v366
      %388 = vmatpush.bf16.msra.mxu0 %v365
      %389 = vmatmul.bf16.gmra.mxu0 %v329
      %v390 = vpop.f32.mrf.mxu0
      %v391 = vadd.f32 %v312, %v390
      %v392 = vpop.f32.mrf.mxu0
      %v393 = vadd.f32 %v314, %v392
      %394 = vmatmul.bf16.gmra.mxu0 %v330
      %v395 = vpop.f32.mrf.mxu0
      %v396 = vadd.f32 %v317, %v395
      %v397 = vpop.f32.mrf.mxu0
      %v398 = vadd.f32 %v319, %v397
      %399 = vdwg.mxu0
      %v400 = vld [vmem:[%s197] sm:$0xf]
      %v401 = vld [vmem:[%s197 + $0x4] sm:$0x1]
      %v402 = vld [vmem:[%s197 + $0x8] sm:$0xf]
      %v403 = vld [vmem:[%s197 + $0xc] sm:$0x1]
      %v404 = vld [vmem:[%s197 + $0x10] sm:$0xf]
      %v405 = vld [vmem:[%s197 + $0x14] sm:$0x1]
      %v406 = vld [vmem:[%s197 + $0x18] sm:$0xf]
      %v407 = vld [vmem:[%s197 + $0x1c] sm:$0x1]
      %vm408 = vsmask.f32 3328
      %vm409 = vsmask.f32 7440
      %vm410 = vmor %vm408, %vm409
      %v412 = vshrl.u32 %v400, 16
      %v414 = vrot.slane %v412, 4
      %v415 = vshll.u32 %v400, 16
      %v417 = vrot.slane %v415, 5
      %v418 = vor.u32 %v414, %v417
      %v419 = vrot.slane %v418, 4
      %v421 = vshll.u32 %v401, 16
      %v423 = vrot.slane %v421, 5
      %v424 = vsel %vm410, %v419, %v423
      %v426 = vshrl.u32 %v402, 16
      %v428 = vrot.slane %v426, 4
      %v429 = vshll.u32 %v402, 16
      %v431 = vrot.slane %v429, 5
      %v432 = vor.u32 %v428, %v431
      %v433 = vrot.slane %v432, 4
      %v435 = vshll.u32 %v403, 16
      %v437 = vrot.slane %v435, 5
      %v438 = vsel %vm410, %v433, %v437
      %v440 = vshrl.u32 %v404, 16
      %v442 = vrot.slane %v440, 4
      %v443 = vshll.u32 %v404, 16
      %v445 = vrot.slane %v443, 5
      %v446 = vor.u32 %v442, %v445
      %v447 = vrot.slane %v446, 4
      %v449 = vshll.u32 %v405, 16
      %v451 = vrot.slane %v449, 5
      %v452 = vsel %vm410, %v447, %v451
      %v454 = vshrl.u32 %v406, 16
      %v456 = vrot.slane %v454, 4
      %v457 = vshll.u32 %v406, 16
      %v459 = vrot.slane %v457, 5
      %v460 = vor.u32 %v456, %v459
      %v461 = vrot.slane %v460, 4
      %v463 = vshll.u32 %v407, 16
      %v465 = vrot.slane %v463, 5
      %v466 = vsel %vm410, %v461, %v465
      %s467 = scalar_lea.vmem %s1, 128
      %v468 = vld [vmem:[%s467] sm:$0xf]
      %v469 = vld [vmem:[%s467 + $0x4] sm:$0xf]
      %v470 = vld [vmem:[%s467 + $0x8] sm:$0xf]
      %v471 = vld [vmem:[%s467 + $0xc] sm:$0xf]
      %v472 = vld [vmem:[%s467 + $0x10] sm:$0xf]
      %v473 = vld [vmem:[%s467 + $0x14] sm:$0xf]
      %v474 = vld [vmem:[%s467 + $0x18] sm:$0xf]
      %v475 = vld [vmem:[%s467 + $0x1c] sm:$0xf]
      %v476 = vld [vmem:[%s467 + $0x20] sm:$0xf]
      %v477 = vld [vmem:[%s467 + $0x24] sm:$0xf]
      %v478 = vld [vmem:[%s467 + $0x28] sm:$0xf]
      %v479 = vld [vmem:[%s467 + $0x2c] sm:$0xf]
      %v480 = vld [vmem:[%s467 + $0x30] sm:$0xf]
      %v481 = vld [vmem:[%s467 + $0x34] sm:$0xf]
      %v482 = vld [vmem:[%s467 + $0x38] sm:$0xf]
      %v483 = vld [vmem:[%s467 + $0x3c] sm:$0xf]
      %v484 = vunpack.c.l.b16 %v424
      %v485 = vunpack.c.l.b16 %v438
      %v486 = vunpack.c.l.b16 %v452
      %v487 = vunpack.c.l.b16 %v466
      %v488 = vpack.c.b16 %v485, %v484
      %v489 = vpack.c.b16 %v487, %v486
      %v508 = vunpack.c.l.b16 %v468
      %v509 = vunpack.c.l.b16 %v469
      %v510 = vunpack.c.l.b16 %v470
      %v511 = vunpack.c.l.b16 %v471
      %v512 = vunpack.c.l.b16 %v472
      %v513 = vunpack.c.l.b16 %v473
      %v514 = vunpack.c.l.b16 %v474
      %v515 = vunpack.c.l.b16 %v475
      %v516 = vunpack.c.l.b16 %v476
      %v517 = vunpack.c.l.b16 %v477
      %v518 = vunpack.c.l.b16 %v478
      %v519 = vunpack.c.l.b16 %v479
      %v520 = vunpack.c.l.b16 %v480
      %v521 = vunpack.c.l.b16 %v481
      %v522 = vunpack.c.l.b16 %v482
      %v523 = vunpack.c.l.b16 %v483
      %v524 = vpack.c.b16 %v509, %v508
      %v525 = vpack.c.b16 %v511, %v510
      %v526 = vpack.c.b16 %v513, %v512
      %v527 = vpack.c.b16 %v515, %v514
      %v528 = vpack.c.b16 %v517, %v516
      %v529 = vpack.c.b16 %v519, %v518
      %v530 = vpack.c.b16 %v521, %v520
      %v531 = vpack.c.b16 %v523, %v522
      %540 = vmatpush.bf16.msra.mxu0 %v531
      %541 = vmatpush.bf16.msra.mxu0 %v530
      %542 = vmatpush.bf16.msra.mxu0 %v529
      %543 = vmatpush.bf16.msra.mxu0 %v528
      %544 = vmatpush.bf16.msra.mxu0 %v527
      %545 = vmatpush.bf16.msra.mxu0 %v526
      %546 = vmatpush.bf16.msra.mxu0 %v525
      %547 = vmatpush.bf16.msra.mxu0 %v524
      %548 = vmatmul.bf16.gmra.mxu0 %v488
      %v549 = vpop.f32.mrf.mxu0
      %v550 = vadd.f32 0.0, %v549
      %v551 = vpop.f32.mrf.mxu0
      %v552 = vadd.f32 0.0, %v551
      %553 = vmatmul.bf16.gmra.mxu0 %v489
      %v554 = vpop.f32.mrf.mxu0
      %v555 = vadd.f32 0.0, %v554
      %v556 = vpop.f32.mrf.mxu0
      %v557 = vadd.f32 0.0, %v556
      %558 = vdwg.mxu0
      %v559 = vadd.f32 %v391, %v550
      %v560 = vadd.f32 %v393, %v552
      %v561 = vadd.f32 %v396, %v555
      %v562 = vadd.f32 %v398, %v557
      %s563 = sadd.s32 %s195, 36
      %s564 = smul.addr %s563, 4
      %s565 = scalar_lea.vmem %s183, %s564
      %v566 = vld [vmem:[%s565] sm:$0xf]
      %v567 = vld [vmem:[%s565 + $0x8] sm:$0xf]
      %v568 = vld [vmem:[%s565 + $0x10] sm:$0xf]
      %v569 = vld [vmem:[%s565 + $0x18] sm:$0xf]
      %s570 = scalar_lea.vmem %s1, 192
      %v571 = vld [vmem:[%s570] sm:$0xf]
      %v572 = vld [vmem:[%s570 + $0x4] sm:$0xf]
      %v573 = vld [vmem:[%s570 + $0x8] sm:$0xf]
      %v574 = vld [vmem:[%s570 + $0xc] sm:$0xf]
      %v575 = vld [vmem:[%s570 + $0x10] sm:$0xf]
      %v576 = vld [vmem:[%s570 + $0x14] sm:$0xf]
      %v577 = vld [vmem:[%s570 + $0x18] sm:$0xf]
      %v578 = vld [vmem:[%s570 + $0x1c] sm:$0xf]
      %v579 = vld [vmem:[%s570 + $0x20] sm:$0xf]
      %v580 = vld [vmem:[%s570 + $0x24] sm:$0xf]
      %v581 = vld [vmem:[%s570 + $0x28] sm:$0xf]
      %v582 = vld [vmem:[%s570 + $0x2c] sm:$0xf]
      %v583 = vld [vmem:[%s570 + $0x30] sm:$0xf]
      %v584 = vld [vmem:[%s570 + $0x34] sm:$0xf]
      %v585 = vld [vmem:[%s570 + $0x38] sm:$0xf]
      %v586 = vld [vmem:[%s570 + $0x3c] sm:$0xf]
      %v591 = vunpack.c.l.b16 %v566
      %v592 = vunpack.c.l.b16 %v567
      %v593 = vunpack.c.l.b16 %v568
      %v594 = vunpack.c.l.b16 %v569
      %v595 = vpack.c.b16 %v592, %v591
      %v596 = vpack.c.b16 %v594, %v593
      %v615 = vunpack.c.l.b16 %v571
      %v616 = vunpack.c.l.b16 %v572
      %v617 = vunpack.c.l.b16 %v573
      %v618 = vunpack.c.l.b16 %v574
      %v619 = vunpack.c.l.b16 %v575
      %v620 = vunpack.c.l.b16 %v576
      %v621 = vunpack.c.l.b16 %v577
      %v622 = vunpack.c.l.b16 %v578
      %v623 = vunpack.c.l.b16 %v579
      %v624 = vunpack.c.l.b16 %v580
      %v625 = vunpack.c.l.b16 %v581
      %v626 = vunpack.c.l.b16 %v582
      %v627 = vunpack.c.l.b16 %v583
      %v628 = vunpack.c.l.b16 %v584
      %v629 = vunpack.c.l.b16 %v585
      %v630 = vunpack.c.l.b16 %v586
      %v631 = vpack.c.b16 %v616, %v615
      %v632 = vpack.c.b16 %v618, %v617
      %v633 = vpack.c.b16 %v620, %v619
      %v634 = vpack.c.b16 %v622, %v621
      %v635 = vpack.c.b16 %v624, %v623
      %v636 = vpack.c.b16 %v626, %v625
      %v637 = vpack.c.b16 %v628, %v627
      %v638 = vpack.c.b16 %v630, %v629
      %647 = vmatpush.bf16.msra.mxu0 %v638
      %648 = vmatpush.bf16.msra.mxu0 %v637
      %649 = vmatpush.bf16.msra.mxu0 %v636
      %650 = vmatpush.bf16.msra.mxu0 %v635
      %651 = vmatpush.bf16.msra.mxu0 %v634
      %652 = vmatpush.bf16.msra.mxu0 %v633
      %653 = vmatpush.bf16.msra.mxu0 %v632
      %654 = vmatpush.bf16.msra.mxu0 %v631
      %655 = vmatmul.bf16.gmra.mxu0 %v595
      %v656 = vpop.f32.mrf.mxu0
      %v657 = vadd.f32 0.0, %v656
      %v658 = vpop.f32.mrf.mxu0
      %v659 = vadd.f32 0.0, %v658
      %660 = vmatmul.bf16.gmra.mxu0 %v596
      %v661 = vpop.f32.mrf.mxu0
      %v662 = vadd.f32 0.0, %v661
      %v663 = vpop.f32.mrf.mxu0
      %v664 = vadd.f32 0.0, %v663
      %665 = vdwg.mxu0
      %v666 = vadd.f32 %v559, %v657
      %v667 = vadd.f32 %v560, %v659
      %v668 = vadd.f32 %v561, %v662
      %v669 = vadd.f32 %v562, %v664
      %s670 = sadd.s32 %s195, 54
      %s671 = smul.addr %s670, 4
      %s672 = scalar_lea.vmem %s183, %s671
      %v673 = vld [vmem:[%s672] sm:$0xf]
      %v674 = vld [vmem:[%s672 + $0x8] sm:$0xf]
      %v675 = vld [vmem:[%s672 + $0x10] sm:$0xf]
      %v676 = vld [vmem:[%s672 + $0x18] sm:$0xf]
      %s677 = scalar_lea.vmem %s1, 256
      %v678 = vld [vmem:[%s677] sm:$0xf]
      %v679 = vld [vmem:[%s677 + $0x4] sm:$0xf]
      %v680 = vld [vmem:[%s677 + $0x8] sm:$0xf]
      %v681 = vld [vmem:[%s677 + $0xc] sm:$0xf]
      %v682 = vld [vmem:[%s677 + $0x10] sm:$0xf]
      %v683 = vld [vmem:[%s677 + $0x14] sm:$0xf]
      %v684 = vld [vmem:[%s677 + $0x18] sm:$0xf]
      %v685 = vld [vmem:[%s677 + $0x1c] sm:$0xf]
      %v686 = vld [vmem:[%s677 + $0x20] sm:$0xf]
      %v687 = vld [vmem:[%s677 + $0x24] sm:$0xf]
      %v688 = vld [vmem:[%s677 + $0x28] sm:$0xf]
      %v689 = vld [vmem:[%s677 + $0x2c] sm:$0xf]
      %v690 = vld [vmem:[%s677 + $0x30] sm:$0xf]
      %v691 = vld [vmem:[%s677 + $0x34] sm:$0xf]
      %v692 = vld [vmem:[%s677 + $0x38] sm:$0xf]
      %v693 = vld [vmem:[%s677 + $0x3c] sm:$0xf]
      %v698 = vunpack.c.l.b16 %v673
      %v699 = vunpack.c.l.b16 %v674
      %v700 = vunpack.c.l.b16 %v675
      %v701 = vunpack.c.l.b16 %v676
      %v702 = vpack.c.b16 %v699, %v698
      %v703 = vpack.c.b16 %v701, %v700
      %v722 = vunpack.c.l.b16 %v678
      %v723 = vunpack.c.l.b16 %v679
      %v724 = vunpack.c.l.b16 %v680
      %v725 = vunpack.c.l.b16 %v681
      %v726 = vunpack.c.l.b16 %v682
      %v727 = vunpack.c.l.b16 %v683
      %v728 = vunpack.c.l.b16 %v684
      %v729 = vunpack.c.l.b16 %v685
      %v730 = vunpack.c.l.b16 %v686
      %v731 = vunpack.c.l.b16 %v687
      %v732 = vunpack.c.l.b16 %v688
      %v733 = vunpack.c.l.b16 %v689
      %v734 = vunpack.c.l.b16 %v690
      %v735 = vunpack.c.l.b16 %v691
      %v736 = vunpack.c.l.b16 %v692
      %v737 = vunpack.c.l.b16 %v693
      %v738 = vpack.c.b16 %v723, %v722
      %v739 = vpack.c.b16 %v725, %v724
      %v740 = vpack.c.b16 %v727, %v726
      %v741 = vpack.c.b16 %v729, %v728
      %v742 = vpack.c.b16 %v731, %v730
      %v743 = vpack.c.b16 %v733, %v732
      %v744 = vpack.c.b16 %v735, %v734
      %v745 = vpack.c.b16 %v737, %v736
      %754 = vmatpush.bf16.msra.mxu0 %v745
      %755 = vmatpush.bf16.msra.mxu0 %v744
      %756 = vmatpush.bf16.msra.mxu0 %v743
      %757 = vmatpush.bf16.msra.mxu0 %v742
      %758 = vmatpush.bf16.msra.mxu0 %v741
      %759 = vmatpush.bf16.msra.mxu0 %v740
      %760 = vmatpush.bf16.msra.mxu0 %v739
      %761 = vmatpush.bf16.msra.mxu0 %v738
      %762 = vmatmul.bf16.gmra.mxu0 %v702
      %v763 = vpop.f32.mrf.mxu0
      %v764 = vadd.f32 0.0, %v763
      %v765 = vpop.f32.mrf.mxu0
      %v766 = vadd.f32 0.0, %v765
      %767 = vmatmul.bf16.gmra.mxu0 %v703
      %v768 = vpop.f32.mrf.mxu0
      %v769 = vadd.f32 0.0, %v768
      %v770 = vpop.f32.mrf.mxu0
      %v771 = vadd.f32 0.0, %v770
      %772 = vdwg.mxu0
      %v773 = vadd.f32 %v666, %v764
      %v774 = vadd.f32 %v667, %v766
      %v775 = vadd.f32 %v668, %v769
      %v776 = vadd.f32 %v669, %v771
      %v777 = vld [vmem:[%s565] sm:$0xf]
      %v778 = vld [vmem:[%s565 + $0x4] sm:$0x1]
      %v779 = vld [vmem:[%s565 + $0x8] sm:$0xf]
      %v780 = vld [vmem:[%s565 + $0xc] sm:$0x1]
      %v781 = vld [vmem:[%s565 + $0x10] sm:$0xf]
      %v782 = vld [vmem:[%s565 + $0x14] sm:$0x1]
      %v783 = vld [vmem:[%s565 + $0x18] sm:$0xf]
      %v784 = vld [vmem:[%s565 + $0x1c] sm:$0x1]
      %v786 = vshrl.u32 %v777, 16
      %v788 = vrot.slane %v786, 4
      %v789 = vshll.u32 %v777, 16
      %v791 = vrot.slane %v789, 5
      %v792 = vor.u32 %v788, %v791
      %v793 = vrot.slane %v792, 4
      %v795 = vshll.u32 %v778, 16
      %v797 = vrot.slane %v795, 5
      %v798 = vsel %vm410, %v793, %v797
      %v800 = vshrl.u32 %v779, 16
      %v802 = vrot.slane %v800, 4
      %v803 = vshll.u32 %v779, 16
      %v805 = vrot.slane %v803, 5
      %v806 = vor.u32 %v802, %v805
      %v807 = vrot.slane %v806, 4
      %v809 = vshll.u32 %v780, 16
      %v811 = vrot.slane %v809, 5
      %v812 = vsel %vm410, %v807, %v811
      %v814 = vshrl.u32 %v781, 16
      %v816 = vrot.slane %v814, 4
      %v817 = vshll.u32 %v781, 16
      %v819 = vrot.slane %v817, 5
      %v820 = vor.u32 %v816, %v819
      %v821 = vrot.slane %v820, 4
      %v823 = vshll.u32 %v782, 16
      %v825 = vrot.slane %v823, 5
      %v826 = vsel %vm410, %v821, %v825
      %v828 = vshrl.u32 %v783, 16
      %v830 = vrot.slane %v828, 4
      %v831 = vshll.u32 %v783, 16
      %v833 = vrot.slane %v831, 5
      %v834 = vor.u32 %v830, %v833
      %v835 = vrot.slane %v834, 4
      %v837 = vshll.u32 %v784, 16
      %v839 = vrot.slane %v837, 5
      %v840 = vsel %vm410, %v835, %v839
      %s841 = scalar_lea.vmem %s1, 320
      %v842 = vld [vmem:[%s841] sm:$0xf]
      %v843 = vld [vmem:[%s841 + $0x4] sm:$0xf]
      %v844 = vld [vmem:[%s841 + $0x8] sm:$0xf]
      %v845 = vld [vmem:[%s841 + $0xc] sm:$0xf]
      %v846 = vld [vmem:[%s841 + $0x10] sm:$0xf]
      %v847 = vld [vmem:[%s841 + $0x14] sm:$0xf]
      %v848 = vld [vmem:[%s841 + $0x18] sm:$0xf]
      %v849 = vld [vmem:[%s841 + $0x1c] sm:$0xf]
      %v850 = vld [vmem:[%s841 + $0x20] sm:$0xf]
      %v851 = vld [vmem:[%s841 + $0x24] sm:$0xf]
      %v852 = vld [vmem:[%s841 + $0x28] sm:$0xf]
      %v853 = vld [vmem:[%s841 + $0x2c] sm:$0xf]
      %v854 = vld [vmem:[%s841 + $0x30] sm:$0xf]
      %v855 = vld [vmem:[%s841 + $0x34] sm:$0xf]
      %v856 = vld [vmem:[%s841 + $0x38] sm:$0xf]
      %v857 = vld [vmem:[%s841 + $0x3c] sm:$0xf]
      %v858 = vunpack.c.l.b16 %v798
      %v859 = vunpack.c.l.b16 %v812
      %v860 = vunpack.c.l.b16 %v826
      %v861 = vunpack.c.l.b16 %v840
      %v862 = vpack.c.b16 %v859, %v858
      %v863 = vpack.c.b16 %v861, %v860
      %v882 = vunpack.c.l.b16 %v842
      %v883 = vunpack.c.l.b16 %v843
      %v884 = vunpack.c.l.b16 %v844
      %v885 = vunpack.c.l.b16 %v845
      %v886 = vunpack.c.l.b16 %v846
      %v887 = vunpack.c.l.b16 %v847
      %v888 = vunpack.c.l.b16 %v848
      %v889 = vunpack.c.l.b16 %v849
      %v890 = vunpack.c.l.b16 %v850
      %v891 = vunpack.c.l.b16 %v851
      %v892 = vunpack.c.l.b16 %v852
      %v893 = vunpack.c.l.b16 %v853
      %v894 = vunpack.c.l.b16 %v854
      %v895 = vunpack.c.l.b16 %v855
      %v896 = vunpack.c.l.b16 %v856
      %v897 = vunpack.c.l.b16 %v857
      %v898 = vpack.c.b16 %v883, %v882
      %v899 = vpack.c.b16 %v885, %v884
      %v900 = vpack.c.b16 %v887, %v886
      %v901 = vpack.c.b16 %v889, %v888
      %v902 = vpack.c.b16 %v891, %v890
      %v903 = vpack.c.b16 %v893, %v892
      %v904 = vpack.c.b16 %v895, %v894
      %v905 = vpack.c.b16 %v897, %v896
      %914 = vmatpush.bf16.msra.mxu0 %v905
      %915 = vmatpush.bf16.msra.mxu0 %v904
      %916 = vmatpush.bf16.msra.mxu0 %v903
      %917 = vmatpush.bf16.msra.mxu0 %v902
      %918 = vmatpush.bf16.msra.mxu0 %v901
      %919 = vmatpush.bf16.msra.mxu0 %v900
      %920 = vmatpush.bf16.msra.mxu0 %v899
      %921 = vmatpush.bf16.msra.mxu0 %v898
      %922 = vmatmul.bf16.gmra.mxu0 %v862
      %v923 = vpop.f32.mrf.mxu0
      %v924 = vadd.f32 0.0, %v923
      %v925 = vpop.f32.mrf.mxu0
      %v926 = vadd.f32 0.0, %v925
      %927 = vmatmul.bf16.gmra.mxu0 %v863
      %v928 = vpop.f32.mrf.mxu0
      %v929 = vadd.f32 0.0, %v928
      %v930 = vpop.f32.mrf.mxu0
      %v931 = vadd.f32 0.0, %v930
      %932 = vdwg.mxu0
      %v933 = vadd.f32 %v773, %v924
      %v934 = vadd.f32 %v774, %v926
      %v935 = vadd.f32 %v775, %v929
      %v936 = vadd.f32 %v776, %v931
      %s937 = sadd.s32 %s194, 1
      %s938 = smul.u32 %s937, 2
      %s939 = smul.addr %s938, 4
      %s940 = scalar_lea.vmem %s183, %s939
      %v941 = vld [vmem:[%s940] sm:$0xf]
      %v942 = vld [vmem:[%s940 + $0x8] sm:$0xf]
      %v943 = vld [vmem:[%s940 + $0x10] sm:$0xf]
      %v944 = vld [vmem:[%s940 + $0x18] sm:$0xf]
      %s945 = scalar_lea.vmem %s1, 384
      %v946 = vld [vmem:[%s945] sm:$0xf]
      %v947 = vld [vmem:[%s945 + $0x4] sm:$0xf]
      %v948 = vld [vmem:[%s945 + $0x8] sm:$0xf]
      %v949 = vld [vmem:[%s945 + $0xc] sm:$0xf]
      %v950 = vld [vmem:[%s945 + $0x10] sm:$0xf]
      %v951 = vld [vmem:[%s945 + $0x14] sm:$0xf]
      %v952 = vld [vmem:[%s945 + $0x18] sm:$0xf]
      %v953 = vld [vmem:[%s945 + $0x1c] sm:$0xf]
      %v954 = vld [vmem:[%s945 + $0x20] sm:$0xf]
      %v955 = vld [vmem:[%s945 + $0x24] sm:$0xf]
      %v956 = vld [vmem:[%s945 + $0x28] sm:$0xf]
      %v957 = vld [vmem:[%s945 + $0x2c] sm:$0xf]
      %v958 = vld [vmem:[%s945 + $0x30] sm:$0xf]
      %v959 = vld [vmem:[%s945 + $0x34] sm:$0xf]
      %v960 = vld [vmem:[%s945 + $0x38] sm:$0xf]
      %v961 = vld [vmem:[%s945 + $0x3c] sm:$0xf]
      %v966 = vunpack.c.l.b16 %v941
      %v967 = vunpack.c.l.b16 %v942
      %v968 = vunpack.c.l.b16 %v943
      %v969 = vunpack.c.l.b16 %v944
      %v970 = vpack.c.b16 %v967, %v966
      %v971 = vpack.c.b16 %v969, %v968
      %v990 = vunpack.c.l.b16 %v946
      %v991 = vunpack.c.l.b16 %v947
      %v992 = vunpack.c.l.b16 %v948
      %v993 = vunpack.c.l.b16 %v949
      %v994 = vunpack.c.l.b16 %v950
      %v995 = vunpack.c.l.b16 %v951
      %v996 = vunpack.c.l.b16 %v952
      %v997 = vunpack.c.l.b16 %v953
      %v998 = vunpack.c.l.b16 %v954
      %v999 = vunpack.c.l.b16 %v955
      %v1000 = vunpack.c.l.b16 %v956
      %v1001 = vunpack.c.l.b16 %v957
      %v1002 = vunpack.c.l.b16 %v958
      %v1003 = vunpack.c.l.b16 %v959
      %v1004 = vunpack.c.l.b16 %v960
      %v1005 = vunpack.c.l.b16 %v961
      %v1006 = vpack.c.b16 %v991, %v990
      %v1007 = vpack.c.b16 %v993, %v992
      %v1008 = vpack.c.b16 %v995, %v994
      %v1009 = vpack.c.b16 %v997, %v996
      %v1010 = vpack.c.b16 %v999, %v998
      %v1011 = vpack.c.b16 %v1001, %v1000
      %v1012 = vpack.c.b16 %v1003, %v1002
      %v1013 = vpack.c.b16 %v1005, %v1004
      %1022 = vmatpush.bf16.msra.mxu0 %v1013
      %1023 = vmatpush.bf16.msra.mxu0 %v1012
      %1024 = vmatpush.bf16.msra.mxu0 %v1011
      %1025 = vmatpush.bf16.msra.mxu0 %v1010
      %1026 = vmatpush.bf16.msra.mxu0 %v1009
      %1027 = vmatpush.bf16.msra.mxu0 %v1008
      %1028 = vmatpush.bf16.msra.mxu0 %v1007
      %1029 = vmatpush.bf16.msra.mxu0 %v1006
      %1030 = vmatmul.bf16.gmra.mxu0 %v970
      %v1031 = vpop.f32.mrf.mxu0
      %v1032 = vadd.f32 0.0, %v1031
      %v1033 = vpop.f32.mrf.mxu0
      %v1034 = vadd.f32 0.0, %v1033
      %1035 = vmatmul.bf16.gmra.mxu0 %v971
      %v1036 = vpop.f32.mrf.mxu0
      %v1037 = vadd.f32 0.0, %v1036
      %v1038 = vpop.f32.mrf.mxu0
      %v1039 = vadd.f32 0.0, %v1038
      %1040 = vdwg.mxu0
      %v1041 = vadd.f32 %v933, %v1032
      %v1042 = vadd.f32 %v934, %v1034
      %v1043 = vadd.f32 %v935, %v1037
      %v1044 = vadd.f32 %v936, %v1039
      %s1045 = sadd.s32 %s938, 18
      %s1046 = smul.addr %s1045, 4
      %s1047 = scalar_lea.vmem %s183, %s1046
      %v1048 = vld [vmem:[%s1047] sm:$0xf]
      %v1049 = vld [vmem:[%s1047 + $0x8] sm:$0xf]
      %v1050 = vld [vmem:[%s1047 + $0x10] sm:$0xf]
      %v1051 = vld [vmem:[%s1047 + $0x18] sm:$0xf]
      %s1052 = scalar_lea.vmem %s1, 448
      %v1053 = vld [vmem:[%s1052] sm:$0xf]
      %v1054 = vld [vmem:[%s1052 + $0x4] sm:$0xf]
      %v1055 = vld [vmem:[%s1052 + $0x8] sm:$0xf]
      %v1056 = vld [vmem:[%s1052 + $0xc] sm:$0xf]
      %v1057 = vld [vmem:[%s1052 + $0x10] sm:$0xf]
      %v1058 = vld [vmem:[%s1052 + $0x14] sm:$0xf]
      %v1059 = vld [vmem:[%s1052 + $0x18] sm:$0xf]
      %v1060 = vld [vmem:[%s1052 + $0x1c] sm:$0xf]
      %v1061 = vld [vmem:[%s1052 + $0x20] sm:$0xf]
      %v1062 = vld [vmem:[%s1052 + $0x24] sm:$0xf]
      %v1063 = vld [vmem:[%s1052 + $0x28] sm:$0xf]
      %v1064 = vld [vmem:[%s1052 + $0x2c] sm:$0xf]
      %v1065 = vld [vmem:[%s1052 + $0x30] sm:$0xf]
      %v1066 = vld [vmem:[%s1052 + $0x34] sm:$0xf]
      %v1067 = vld [vmem:[%s1052 + $0x38] sm:$0xf]
      %v1068 = vld [vmem:[%s1052 + $0x3c] sm:$0xf]
      %v1073 = vunpack.c.l.b16 %v1048
      %v1074 = vunpack.c.l.b16 %v1049
      %v1075 = vunpack.c.l.b16 %v1050
      %v1076 = vunpack.c.l.b16 %v1051
      %v1077 = vpack.c.b16 %v1074, %v1073
      %v1078 = vpack.c.b16 %v1076, %v1075
      %v1097 = vunpack.c.l.b16 %v1053
      %v1098 = vunpack.c.l.b16 %v1054
      %v1099 = vunpack.c.l.b16 %v1055
      %v1100 = vunpack.c.l.b16 %v1056
      %v1101 = vunpack.c.l.b16 %v1057
      %v1102 = vunpack.c.l.b16 %v1058
      %v1103 = vunpack.c.l.b16 %v1059
      %v1104 = vunpack.c.l.b16 %v1060
      %v1105 = vunpack.c.l.b16 %v1061
      %v1106 = vunpack.c.l.b16 %v1062
      %v1107 = vunpack.c.l.b16 %v1063
      %v1108 = vunpack.c.l.b16 %v1064
      %v1109 = vunpack.c.l.b16 %v1065
      %v1110 = vunpack.c.l.b16 %v1066
      %v1111 = vunpack.c.l.b16 %v1067
      %v1112 = vunpack.c.l.b16 %v1068
      %v1113 = vpack.c.b16 %v1098, %v1097
      %v1114 = vpack.c.b16 %v1100, %v1099
      %v1115 = vpack.c.b16 %v1102, %v1101
      %v1116 = vpack.c.b16 %v1104, %v1103
      %v1117 = vpack.c.b16 %v1106, %v1105
      %v1118 = vpack.c.b16 %v1108, %v1107
      %v1119 = vpack.c.b16 %v1110, %v1109
      %v1120 = vpack.c.b16 %v1112, %v1111
      %1129 = vmatpush.bf16.msra.mxu0 %v1120
      %1130 = vmatpush.bf16.msra.mxu0 %v1119
      %1131 = vmatpush.bf16.msra.mxu0 %v1118
      %1132 = vmatpush.bf16.msra.mxu0 %v1117
      %1133 = vmatpush.bf16.msra.mxu0 %v1116
      %1134 = vmatpush.bf16.msra.mxu0 %v1115
      %1135 = vmatpush.bf16.msra.mxu0 %v1114
      %1136 = vmatpush.bf16.msra.mxu0 %v1113
      %1137 = vmatmul.bf16.gmra.mxu0 %v1077
      %v1138 = vpop.f32.mrf.mxu0
      %v1139 = vadd.f32 0.0, %v1138
      %v1140 = vpop.f32.mrf.mxu0
      %v1141 = vadd.f32 0.0, %v1140
      %1142 = vmatmul.bf16.gmra.mxu0 %v1078
      %v1143 = vpop.f32.mrf.mxu0
      %v1144 = vadd.f32 0.0, %v1143
      %v1145 = vpop.f32.mrf.mxu0
      %v1146 = vadd.f32 0.0, %v1145
      %1147 = vdwg.mxu0
      %v1148 = vadd.f32 %v1041, %v1139
      %v1149 = vadd.f32 %v1042, %v1141
      %v1150 = vadd.f32 %v1043, %v1144
      %v1151 = vadd.f32 %v1044, %v1146
      %v1152 = vld [vmem:[%s940] sm:$0xf]
      %v1153 = vld [vmem:[%s940 + $0x4] sm:$0x1]
      %v1154 = vld [vmem:[%s940 + $0x8] sm:$0xf]
      %v1155 = vld [vmem:[%s940 + $0xc] sm:$0x1]
      %v1156 = vld [vmem:[%s940 + $0x10] sm:$0xf]
      %v1157 = vld [vmem:[%s940 + $0x14] sm:$0x1]
      %v1158 = vld [vmem:[%s940 + $0x18] sm:$0xf]
      %v1159 = vld [vmem:[%s940 + $0x1c] sm:$0x1]
      %v1161 = vshrl.u32 %v1152, 16
      %v1163 = vrot.slane %v1161, 4
      %v1164 = vshll.u32 %v1152, 16
      %v1166 = vrot.slane %v1164, 5
      %v1167 = vor.u32 %v1163, %v1166
      %v1168 = vrot.slane %v1167, 4
      %v1170 = vshll.u32 %v1153, 16
      %v1172 = vrot.slane %v1170, 5
      %v1173 = vsel %vm410, %v1168, %v1172
      %v1175 = vshrl.u32 %v1154, 16
      %v1177 = vrot.slane %v1175, 4
      %v1178 = vshll.u32 %v1154, 16
      %v1180 = vrot.slane %v1178, 5
      %v1181 = vor.u32 %v1177, %v1180
      %v1182 = vrot.slane %v1181, 4
      %v1184 = vshll.u32 %v1155, 16
      %v1186 = vrot.slane %v1184, 5
      %v1187 = vsel %vm410, %v1182, %v1186
      %v1189 = vshrl.u32 %v1156, 16
      %v1191 = vrot.slane %v1189, 4
      %v1192 = vshll.u32 %v1156, 16
      %v1194 = vrot.slane %v1192, 5
      %v1195 = vor.u32 %v1191, %v1194
      %v1196 = vrot.slane %v1195, 4
      %v1198 = vshll.u32 %v1157, 16
      %v1200 = vrot.slane %v1198, 5
      %v1201 = vsel %vm410, %v1196, %v1200
      %v1203 = vshrl.u32 %v1158, 16
      %v1205 = vrot.slane %v1203, 4
      %v1206 = vshll.u32 %v1158, 16
      %v1208 = vrot.slane %v1206, 5
      %v1209 = vor.u32 %v1205, %v1208
      %v1210 = vrot.slane %v1209, 4
      %v1212 = vshll.u32 %v1159, 16
      %v1214 = vrot.slane %v1212, 5
      %v1215 = vsel %vm410, %v1210, %v1214
      %s1216 = scalar_lea.vmem %s1, 512
      %v1217 = vld [vmem:[%s1216] sm:$0xf]
      %v1218 = vld [vmem:[%s1216 + $0x4] sm:$0xf]
      %v1219 = vld [vmem:[%s1216 + $0x8] sm:$0xf]
      %v1220 = vld [vmem:[%s1216 + $0xc] sm:$0xf]
      %v1221 = vld [vmem:[%s1216 + $0x10] sm:$0xf]
      %v1222 = vld [vmem:[%s1216 + $0x14] sm:$0xf]
      %v1223 = vld [vmem:[%s1216 + $0x18] sm:$0xf]
      %v1224 = vld [vmem:[%s1216 + $0x1c] sm:$0xf]
      %v1225 = vld [vmem:[%s1216 + $0x20] sm:$0xf]
      %v1226 = vld [vmem:[%s1216 + $0x24] sm:$0xf]
      %v1227 = vld [vmem:[%s1216 + $0x28] sm:$0xf]
      %v1228 = vld [vmem:[%s1216 + $0x2c] sm:$0xf]
      %v1229 = vld [vmem:[%s1216 + $0x30] sm:$0xf]
      %v1230 = vld [vmem:[%s1216 + $0x34] sm:$0xf]
      %v1231 = vld [vmem:[%s1216 + $0x38] sm:$0xf]
      %v1232 = vld [vmem:[%s1216 + $0x3c] sm:$0xf]
      %v1233 = vunpack.c.l.b16 %v1173
      %v1234 = vunpack.c.l.b16 %v1187
      %v1235 = vunpack.c.l.b16 %v1201
      %v1236 = vunpack.c.l.b16 %v1215
      %v1237 = vpack.c.b16 %v1234, %v1233
      %v1238 = vpack.c.b16 %v1236, %v1235
      %v1257 = vunpack.c.l.b16 %v1217
      %v1258 = vunpack.c.l.b16 %v1218
      %v1259 = vunpack.c.l.b16 %v1219
      %v1260 = vunpack.c.l.b16 %v1220
      %v1261 = vunpack.c.l.b16 %v1221
      %v1262 = vunpack.c.l.b16 %v1222
      %v1263 = vunpack.c.l.b16 %v1223
      %v1264 = vunpack.c.l.b16 %v1224
      %v1265 = vunpack.c.l.b16 %v1225
      %v1266 = vunpack.c.l.b16 %v1226
      %v1267 = vunpack.c.l.b16 %v1227
      %v1268 = vunpack.c.l.b16 %v1228
      %v1269 = vunpack.c.l.b16 %v1229
      %v1270 = vunpack.c.l.b16 %v1230
      %v1271 = vunpack.c.l.b16 %v1231
      %v1272 = vunpack.c.l.b16 %v1232
      %v1273 = vpack.c.b16 %v1258, %v1257
      %v1274 = vpack.c.b16 %v1260, %v1259
      %v1275 = vpack.c.b16 %v1262, %v1261
      %v1276 = vpack.c.b16 %v1264, %v1263
      %v1277 = vpack.c.b16 %v1266, %v1265
      %v1278 = vpack.c.b16 %v1268, %v1267
      %v1279 = vpack.c.b16 %v1270, %v1269
      %v1280 = vpack.c.b16 %v1272, %v1271
      %1289 = vmatpush.bf16.msra.mxu0 %v1280
      %1290 = vmatpush.bf16.msra.mxu0 %v1279
      %1291 = vmatpush.bf16.msra.mxu0 %v1278
      %1292 = vmatpush.bf16.msra.mxu0 %v1277
      %1293 = vmatpush.bf16.msra.mxu0 %v1276
      %1294 = vmatpush.bf16.msra.mxu0 %v1275
      %1295 = vmatpush.bf16.msra.mxu0 %v1274
      %1296 = vmatpush.bf16.msra.mxu0 %v1273
      %1297 = vmatmul.bf16.gmra.mxu0 %v1237
      %v1298 = vpop.f32.mrf.mxu0
      %v1299 = vadd.f32 0.0, %v1298
      %v1300 = vpop.f32.mrf.mxu0
      %v1301 = vadd.f32 0.0, %v1300
      %1302 = vmatmul.bf16.gmra.mxu0 %v1238
      %v1303 = vpop.f32.mrf.mxu0
      %v1304 = vadd.f32 0.0, %v1303
      %v1305 = vpop.f32.mrf.mxu0
      %v1306 = vadd.f32 0.0, %v1305
      %1307 = vdwg.mxu0
      %v1308 = vadd.f32 %v1148, %v1299
      %v1309 = vadd.f32 %v1149, %v1301
      %v1310 = vadd.f32 %v1150, %v1304
      %v1311 = vadd.f32 %v1151, %v1306
      %v1312 = vld [vmem:[%s2] sm:$0x1]
      %v1314 = vperm.slane %v1312, 0
      %v1316 = vadd.f32 %v1308, %v1314
      %v1317 = vadd.f32 %v1309, %v1314
      %v1318 = vadd.f32 %v1310, %v1314
      %v1319 = vadd.f32 %v1311, %v1314
      %v1320 = vmax.f32 %v1316, 0.0
      %v1321 = vmax.f32 %v1317, 0.0
      %v1322 = vmax.f32 %v1318, 0.0
      %v1323 = vmax.f32 %v1319, 0.0
      %v1324 = vpack.c.bf16 %v1320, %v1320
      %v1325 = vpack.c.bf16 %v1321, %v1321
      %v1326 = vpack.c.bf16 %v1322, %v1322
      %v1327 = vpack.c.bf16 %v1323, %v1323
      %1328 = vst [vmem:[%s192] sm:$0xf] %v1324
      %1329 = vst [vmem:[%s192 + $0x4] sm:$0xf] %v1325
      %1330 = vst [vmem:[%s192 + $0x8] sm:$0xf] %v1326
      %1331 = vst [vmem:[%s192 + $0xc] sm:$0xf] %v1327
      %s1332 = smul.u32 4, %s19
      %p1333 = scmp.lt.s32.totalorder %s18, 1
      %s1334 = scalar_select %p1333, %s18, 1
      %p1335 = scmp.lt.s32.totalorder %s1332, 7
      %s1336 = scalar_select %p1335, %s1332, 7
      %s1337 = smul.addr %s1334, 8
      %s1338 = sadd.s32 %s1336, %s1337
      %s1339 = smul.addr %s1338, 4
      %s1340 = scalar_lea.vmem %s3, %s1339
      // Predicated region
      $region33: #{conv_block_forward.2} parent=31 // pred_check
        %p1341 = pneg %p114
      $region34: #{conv_block_forward.2} parent=31 // pred_check_branch
        %1343 = sbr.rel (%p1341) target = $region36
      $region35: #{conv_block_forward.2} parent=31 // pred_region
        %s1344 = smul.u32 4, %s19
      $region36: #{conv_block_forward.2} parent=31 // pred_fallthru
        _
    $region32: #{conv_block_forward.2} parent=5 // pred_fallthru
      _
    %p1345 = scmp.le.s32.totalorder 2, %s9
    // Predicated region
    $region37: #{conv_block_forward.2} parent=5 // pred_check
      %p1346 = pneg %p1345
    $region38: #{conv_block_forward.2} parent=5 // pred_check_branch
      %1348 = sbr.rel (%p1346) target = $region40
    $region39: #{conv_block_forward.2} parent=5 // pred_region
      %s1349 = ssub.s32 %s9, 2
      // Predicated region
      $region41: #{conv_block_forward.2} parent=39 // pred_check
        %p1350 = pneg %p120
      $region42: #{conv_block_forward.2} parent=39 // pred_check_branch
        %1352 = sbr.rel (%p1350) target = $region44
      $region43: #{conv_block_forward.2} parent=39 // pred_region
        %s1353 = smul.u32 4, %s21
        %p1354 = scmp.lt.s32.totalorder %s20, 1
        %s1355 = scalar_select %p1354, %s20, 1
        %p1356 = scmp.lt.s32.totalorder %s1353, 7
        %s1357 = scalar_select %p1356, %s1353, 7
        %s1358 = smul.addr %s1355, 8
        %s1359 = sadd.s32 %s1357, %s1358
        %s1360 = smul.addr %s1359, 4
        %s1361 = scalar_lea.vmem %s3, %s1360
      $region44: #{conv_block_forward.2} parent=39 // pred_fallthru
        _
    $region40: #{conv_block_forward.2} parent=5 // pred_fallthru
      _
  $region6: #{conv_block_forward.2} parent=0 // loop_footer
    %s13 = sadd.s32 1, %s9
  $region7: #{conv_block_forward.2} parent=0 // loop_footer_branch
    %8 = sbr.rel target = $region3
  $region8: #{conv_block_forward.2} parent=0 // loop_exit
    _

</llo_original>
